<compile_context>
chip_gen: v7x
topology: tpu7x:2x2x1
jax: 0.10.0
libtpu: 0.0.40
codegen_flags: <defaults>
</compile_context>

<pallas_src>
import jax
import jax.numpy as jnp
import numpy as np
from jax.experimental import pallas as pl
from jax.experimental.pallas import tpu as pltpu

# ---------------- model hyper-params (small, consistent with the module) ----
VOCAB = 100     # vocab_size
EMBED = 32      # embed_dim (e)
LSTM_DIM = 32   # lstm_dim (u); bilstm=False so u stays 32
R = 16          # r
C = 4           # tagset_size
BATCH = 2       # batch_size
SLEN = 8        # sequence length


# ========================= fused forward kernel ==============================
def new_self_attn_kernel(x_ref, wih_ref, whh_ref, bias_ref,
                         wa_ref, ba_ref, w1_ref, b1_ref, w2_ref, b2_ref,
                         out_ref):
    # x_ref   : (slen*batch, e)   flattened embeddings, row = t*batch + b
    # wih_ref : (e, 4u)           W_ih^T
    # whh_ref : (u, 4u)           W_hh^T
    # bias_ref: (1, 4u)           b_ih + b_hh
    # wa_ref  : (u, r)  ba_ref: (1, r)      attn1 (Linear(u, r) with bias)
    # w1_ref  : (1, u)  b1_ref: (1, 1)      mlp1  (Linear(u, 1))
    # w2_ref  : (r, c)  b2_ref: (1, c)      mlp2  (Linear(r, c))
    # out_ref : (batch, c)
    batch = out_ref.shape[0]
    u = whh_ref.shape[0]
    r = wa_ref.shape[1]
    slen = x_ref.shape[0] // batch

    # (1) Hoisted input projection: single well-shaped matmul off the serial path.
    gates_x = (jnp.dot(x_ref[...], wih_ref[...],
                       preferred_element_type=jnp.float32)
               + bias_ref[...])                                  # (slen*batch, 4u)

    whh = whh_ref[...]
    wa = wa_ref[...]
    ba = ba_ref[...]
    w1 = w1_ref[...]                                             # (1, u)

    h = jnp.zeros((batch, u), jnp.float32)
    c = jnp.zeros((batch, u), jnp.float32)
    m1_acc = jnp.zeros((batch, r), jnp.float32)

    # (2) Fully-unrolled recurrence (slen is tiny and static).  Only the
    #     h @ W_hh^T matmul is on the serial dependence chain; the attention
    #     contribution of each step is accumulated online so H is never stored.
    for t in range(slen):
        gates = gates_x[t * batch:(t + 1) * batch, :] + jnp.dot(
            h, whh, preferred_element_type=jnp.float32)          # (batch, 4u)
        i_g = jax.nn.sigmoid(gates[:, 0 * u:1 * u])              # PyTorch order i,f,g,o
        f_g = jax.nn.sigmoid(gates[:, 1 * u:2 * u])
        g_g = jnp.tanh(gates[:, 2 * u:3 * u])
        o_g = jax.nn.sigmoid(gates[:, 3 * u:4 * u])
        c = f_g * c + i_g * g_g
        h = o_g * jnp.tanh(c)

        # attn1 row for this step + re-associated bmm/mlp1 contraction:
        #   A_t      = h @ wa^T + ba            (batch, r)
        #   hw1_t    = <h, w1>                  (batch, 1)
        #   m1_acc  += A_t * hw1_t
        a_t = jnp.dot(h, wa, preferred_element_type=jnp.float32) + ba
        hw1_t = jnp.sum(h * w1, axis=-1, keepdims=True)
        m1_acc = m1_acc + a_t * hw1_t

    # (3) mlp1 ReLU -> mlp2 ReLU -> softmax over classes (F.softmax dim=1).
    m1 = jnp.maximum(m1_acc + b1_ref[...], 0.0)                  # (batch, r)
    logits = jnp.dot(m1, w2_ref[...],
                     preferred_element_type=jnp.float32) + b2_ref[...]
    logits = jnp.maximum(logits, 0.0)                            # (batch, c)
    mx = jnp.max(logits, axis=-1, keepdims=True)
    ex = jnp.exp(logits - mx)
    out_ref[...] = ex / jnp.sum(ex, axis=-1, keepdims=True)


def new_self_attn_pallas(words, p):
    # embedding gather is glue (no hot compute)
    embeds = p['embed'][words]                                   # (slen, batch, e)
    slen, batch, e = embeds.shape
    u = p['w_hh'].shape[1]
    r = p['wa'].shape[0]
    c = p['w2'].shape[0]

    x_flat = embeds.reshape(slen * batch, e)                     # row = t*batch + b
    wih_t = p['w_ih'].T                                          # (e, 4u)
    whh_t = p['w_hh'].T                                          # (u, 4u)
    bias = (p['b_ih'] + p['b_hh']).reshape(1, 4 * u)
    wa_t = p['wa'].T                                             # (u, r)
    ba = p['ba'].reshape(1, r)
    w1_row = p['w1'].reshape(1, u)
    b1 = p['b1'].reshape(1, 1)
    w2_t = p['w2'].T                                             # (r, c)
    b2 = p['b2'].reshape(1, c)

    return pl.pallas_call(
        new_self_attn_kernel,
        out_shape=jax.ShapeDtypeStruct((batch, c), jnp.float32),
        grid=(1,),
        in_specs=[
            pl.BlockSpec((slen * batch, e), lambda i: (0, 0)),
            pl.BlockSpec((e, 4 * u), lambda i: (0, 0)),
            pl.BlockSpec((u, 4 * u), lambda i: (0, 0)),
            pl.BlockSpec((1, 4 * u), lambda i: (0, 0)),
            pl.BlockSpec((u, r), lambda i: (0, 0)),
            pl.BlockSpec((1, r), lambda i: (0, 0)),
            pl.BlockSpec((1, u), lambda i: (0, 0)),
            pl.BlockSpec((1, 1), lambda i: (0, 0)),
            pl.BlockSpec((r, c), lambda i: (0, 0)),
            pl.BlockSpec((1, c), lambda i: (0, 0)),
        ],
        out_specs=pl.BlockSpec((batch, c), lambda i: (0, 0)),
        compiler_params=pltpu.CompilerParams(
            dimension_semantics=("arbitrary",)),
    )(x_flat, wih_t, whh_t, bias, wa_t, ba, w1_row, b1, w2_t, b2)


# ============================ pure-JAX reference =============================
def ref_forward(words, p):
    embeds = p['embed'][words]                                   # (slen, batch, e)

    def step(carry, x):
        h, c = carry
        gates = x @ p['w_ih'].T + p['b_ih'] + h @ p['w_hh'].T + p['b_hh']
        i, f, g, o = jnp.split(gates, 4, axis=-1)
        i = jax.nn.sigmoid(i); f = jax.nn.sigmoid(f)
        g = jnp.tanh(g); o = jax.nn.sigmoid(o)
        c = f * c + i * g
        h = o * jnp.tanh(c)
        return (h, c), h

    init = (jnp.zeros((BATCH, LSTM_DIM), jnp.float32),
            jnp.zeros((BATCH, LSTM_DIM), jnp.float32))
    _, H = jax.lax.scan(step, init, embeds)                      # (slen, batch, u)

    H_flat = H.reshape(SLEN * BATCH, LSTM_DIM)                   # H.view(batch*slen, u)
    A = H_flat @ p['wa'].T + p['ba']                             # attn1
    A3 = A.reshape(SLEN, BATCH, R)
    Hb = jnp.transpose(H, (1, 0, 2))                             # (batch, slen, u)
    Ab = jnp.transpose(A3, (1, 2, 0))                            # (batch, r, slen)
    M = jnp.einsum('brs,bsu->bru', Ab, Hb)                       # torch.bmm
    Mf = M.reshape(BATCH * R, LSTM_DIM)
    m1 = jax.nn.relu(Mf @ p['w1'].T + p['b1']).reshape(BATCH, R)
    m2 = jax.nn.relu(m1 @ p['w2'].T + p['b2'])
    return jax.nn.softmax(m2, axis=-1)                           # F.softmax (dim=1 for 2-D)


# ================================== main =====================================
if __name__ == "__main__":
    key = jax.random.PRNGKey(0)
    ks = jax.random.split(key, 13)

    def unif(k, shape, s=0.1):
        return jax.random.uniform(k, shape, jnp.float32, minval=-s, maxval=s)

    params = {
        'embed': unif(ks[0], (VOCAB, EMBED)),
        'w_ih':  unif(ks[1], (4 * LSTM_DIM, EMBED)),
        'w_hh':  unif(ks[2], (4 * LSTM_DIM, LSTM_DIM)),
        'b_ih':  unif(ks[3], (4 * LSTM_DIM,)),
        'b_hh':  unif(ks[4], (4 * LSTM_DIM,)),
        'wa':    unif(ks[5], (R, LSTM_DIM)),          # attn1: Linear(u, r)
        'ba':    unif(ks[6], (R,)),                   # attn1 bias (CPU branch of the module)
        'w1':    unif(ks[7], (1, LSTM_DIM)),          # mlp1: Linear(u, 1)
        'b1':    unif(ks[8], (1,)),
        'w2':    unif(ks[9], (C, R)),                 # mlp2: Linear(r, c)
        'b2':    unif(ks[10], (C,)),
    }

    words = jax.random.randint(jax.random.PRNGKey(42), (SLEN, BATCH), 0, VOCAB)

    out = jax.block_until_ready(new_self_attn_pallas(words, params))
    ref = jax.block_until_ready(ref_forward(words, params))

    assert out.shape == (BATCH, C), out.shape
    np.testing.assert_allclose(np.asarray(out), np.asarray(ref), atol=1e-5, rtol=1e-5)

    print("KERNEL_OK")
</pallas_src>

<mosaic_0001>
module attributes {stable_mosaic.version = 11 : i64} {
  func.func @new_self_attn_kernel(%arg0: i32, %arg1: memref<16x32xf32, #tpu.memory_space<vmem>>, %arg2: memref<32x128xf32, #tpu.memory_space<vmem>>, %arg3: memref<32x128xf32, #tpu.memory_space<vmem>>, %arg4: memref<1x128xf32, #tpu.memory_space<vmem>>, %arg5: memref<32x16xf32, #tpu.memory_space<vmem>>, %arg6: memref<1x16xf32, #tpu.memory_space<vmem>>, %arg7: memref<1x32xf32, #tpu.memory_space<vmem>>, %arg8: memref<1x1xf32, #tpu.memory_space<vmem>>, %arg9: memref<16x4xf32, #tpu.memory_space<vmem>>, %arg10: memref<1x4xf32, #tpu.memory_space<vmem>>, %arg11: memref<2x4xf32, #tpu.memory_space<vmem>>) attributes {dimension_semantics = [#tpu.dimension_semantics<arbitrary>], iteration_bounds = array<i64: 1>, scalar_prefetch = 0 : i64, scratch_operands = 0 : i64, tpu.core_type = #tpu.core_type<tc>, window_params = [{pipeline_mode = #tpu.pipeline_mode<synchronous>, transform_indices = @transform_0, window_bounds = array<i64: 16, 32>}, {pipeline_mode = #tpu.pipeline_mode<synchronous>, transform_indices = @transform_1, window_bounds = array<i64: 32, 128>}, {pipeline_mode = #tpu.pipeline_mode<synchronous>, transform_indices = @transform_2, window_bounds = array<i64: 32, 128>}, {pipeline_mode = #tpu.pipeline_mode<synchronous>, transform_indices = @transform_3, window_bounds = array<i64: 1, 128>}, {pipeline_mode = #tpu.pipeline_mode<synchronous>, transform_indices = @transform_4, window_bounds = array<i64: 32, 16>}, {pipeline_mode = #tpu.pipeline_mode<synchronous>, transform_indices = @transform_5, window_bounds = array<i64: 1, 16>}, {pipeline_mode = #tpu.pipeline_mode<synchronous>, transform_indices = @transform_6, window_bounds = array<i64: 1, 32>}, {pipeline_mode = #tpu.pipeline_mode<synchronous>, transform_indices = @transform_7, window_bounds = array<i64: 1, 1>}, {pipeline_mode = #tpu.pipeline_mode<synchronous>, transform_indices = @transform_8, window_bounds = array<i64: 16, 4>}, {pipeline_mode = #tpu.pipeline_mode<synchronous>, transform_indices = @transform_9, window_bounds = array<i64: 1, 4>}, {pipeline_mode = #tpu.pipeline_mode<synchronous>, transform_indices = @transform_10, window_bounds = array<i64: 2, 4>}]} {
    %c0 = arith.constant 0 : index
    %c0_0 = arith.constant 0 : index
    %0 = vector.load %arg1[%c0, %c0_0] : memref<16x32xf32, #tpu.memory_space<vmem>>, vector<16x32xf32>
    %c0_1 = arith.constant 0 : index
    %c0_2 = arith.constant 0 : index
    %1 = vector.load %arg2[%c0_1, %c0_2] : memref<32x128xf32, #tpu.memory_space<vmem>>, vector<32x128xf32>
    %cst = arith.constant dense<0.000000e+00> : vector<16x128xf32>
    %2 = tpu.matmul %0, %1, %cst {dimension_numbers = #tpu.dot_dimension_numbers<[1], [0], [0], [1], [0, 0, 1, 1], [], []>} : vector<16x32xf32>, vector<32x128xf32>, vector<16x128xf32> -> vector<16x128xf32>
    %c0_3 = arith.constant 0 : index
    %c0_4 = arith.constant 0 : index
    %3 = vector.load %arg4[%c0_3, %c0_4] : memref<1x128xf32, #tpu.memory_space<vmem>>, vector<1x128xf32>
    %4 = vector.broadcast %3 : vector<1x128xf32> to vector<16x128xf32>
    %5 = arith.addf %2, %4 : vector<16x128xf32>
    %c0_5 = arith.constant 0 : index
    %c0_6 = arith.constant 0 : index
    %6 = vector.load %arg3[%c0_5, %c0_6] : memref<32x128xf32, #tpu.memory_space<vmem>>, vector<32x128xf32>
    %c0_7 = arith.constant 0 : index
    %c0_8 = arith.constant 0 : index
    %7 = vector.load %arg5[%c0_7, %c0_8] : memref<32x16xf32, #tpu.memory_space<vmem>>, vector<32x16xf32>
    %c0_9 = arith.constant 0 : index
    %c0_10 = arith.constant 0 : index
    %8 = vector.load %arg6[%c0_9, %c0_10] : memref<1x16xf32, #tpu.memory_space<vmem>>, vector<1x16xf32>
    %c0_11 = arith.constant 0 : index
    %c0_12 = arith.constant 0 : index
    %9 = vector.load %arg7[%c0_11, %c0_12] : memref<1x32xf32, #tpu.memory_space<vmem>>, vector<1x32xf32>
    %cst_13 = arith.constant 0.000000e+00 : f32
    %10 = vector.broadcast %cst_13 : f32 to vector<2x32xf32>
    %cst_14 = arith.constant 0.000000e+00 : f32
    %11 = vector.broadcast %cst_14 : f32 to vector<2x32xf32>
    %cst_15 = arith.constant 0.000000e+00 : f32
    %12 = vector.broadcast %cst_15 : f32 to vector<2x16xf32>
    %13 = vector.extract_strided_slice %5 {offsets = [0, 0], sizes = [2, 128], strides = [1, 1]} : vector<16x128xf32> to vector<2x128xf32>
    %cst_16 = arith.constant dense<0.000000e+00> : vector<2x128xf32>
    %14 = tpu.matmul %10, %6, %cst_16 {dimension_numbers = #tpu.dot_dimension_numbers<[1], [0], [0], [1], [0, 0, 1, 1], [], []>} : vector<2x32xf32>, vector<32x128xf32>, vector<2x128xf32> -> vector<2x128xf32>
    %15 = arith.addf %13, %14 : vector<2x128xf32>
    %16 = vector.extract_strided_slice %15 {offsets = [0, 0], sizes = [2, 32], strides = [1, 1]} : vector<2x128xf32> to vector<2x32xf32>
    %17 = arith.negf %16 : vector<2x32xf32>
    %18 = math.exp %17 : vector<2x32xf32>
    %cst_17 = arith.constant 1.000000e+00 : f32
    %19 = vector.broadcast %cst_17 : f32 to vector<2x32xf32>
    %20 = arith.addf %19, %18 : vector<2x32xf32>
    %21 = arith.divf %19, %20 : vector<2x32xf32>
    %22 = vector.extract_strided_slice %15 {offsets = [0, 32], sizes = [2, 32], strides = [1, 1]} : vector<2x128xf32> to vector<2x32xf32>
    %23 = arith.negf %22 : vector<2x32xf32>
    %24 = math.exp %23 : vector<2x32xf32>
    %cst_18 = arith.constant 1.000000e+00 : f32
    %25 = vector.broadcast %cst_18 : f32 to vector<2x32xf32>
    %26 = arith.addf %25, %24 : vector<2x32xf32>
    %27 = arith.divf %25, %26 : vector<2x32xf32>
    %28 = vector.extract_strided_slice %15 {offsets = [0, 64], sizes = [2, 32], strides = [1, 1]} : vector<2x128xf32> to vector<2x32xf32>
    %29 = math.tanh %28 : vector<2x32xf32>
    %30 = vector.extract_strided_slice %15 {offsets = [0, 96], sizes = [2, 32], strides = [1, 1]} : vector<2x128xf32> to vector<2x32xf32>
    %31 = arith.negf %30 : vector<2x32xf32>
    %32 = math.exp %31 : vector<2x32xf32>
    %cst_19 = arith.constant 1.000000e+00 : f32
    %33 = vector.broadcast %cst_19 : f32 to vector<2x32xf32>
    %34 = arith.addf %33, %32 : vector<2x32xf32>
    %35 = arith.divf %33, %34 : vector<2x32xf32>
    %36 = arith.mulf %27, %11 : vector<2x32xf32>
    %37 = arith.mulf %21, %29 : vector<2x32xf32>
    %38 = arith.addf %36, %37 : vector<2x32xf32>
    %39 = math.tanh %38 : vector<2x32xf32>
    %40 = arith.mulf %35, %39 : vector<2x32xf32>
    %cst_20 = arith.constant dense<0.000000e+00> : vector<2x16xf32>
    %41 = tpu.matmul %40, %7, %cst_20 {dimension_numbers = #tpu.dot_dimension_numbers<[1], [0], [0], [1], [0, 0, 1, 1], [], []>} : vector<2x32xf32>, vector<32x16xf32>, vector<2x16xf32> -> vector<2x16xf32>
    %42 = vector.broadcast %8 : vector<1x16xf32> to vector<2x16xf32>
    %43 = arith.addf %41, %42 : vector<2x16xf32>
    %44 = vector.broadcast %9 : vector<1x32xf32> to vector<2x32xf32>
    %45 = arith.mulf %40, %44 : vector<2x32xf32>
    %cst_21 = arith.constant dense<0.000000e+00> : vector<2xf32>
    %46 = vector.multi_reduction <add>, %45, %cst_21 [1] : vector<2x32xf32> to vector<2xf32>
    %47 = vector.shape_cast %46 : vector<2xf32> to vector<2x1xf32>
    %48 = vector.broadcast %47 : vector<2x1xf32> to vector<2x16xf32>
    %49 = arith.mulf %43, %48 : vector<2x16xf32>
    %50 = arith.addf %12, %49 : vector<2x16xf32>
    %51 = vector.extract_strided_slice %5 {offsets = [2, 0], sizes = [2, 128], strides = [1, 1]} : vector<16x128xf32> to vector<2x128xf32>
    %cst_22 = arith.constant dense<0.000000e+00> : vector<2x128xf32>
    %52 = tpu.matmul %40, %6, %cst_22 {dimension_numbers = #tpu.dot_dimension_numbers<[1], [0], [0], [1], [0, 0, 1, 1], [], []>} : vector<2x32xf32>, vector<32x128xf32>, vector<2x128xf32> -> vector<2x128xf32>
    %53 = arith.addf %51, %52 : vector<2x128xf32>
    %54 = vector.extract_strided_slice %53 {offsets = [0, 0], sizes = [2, 32], strides = [1, 1]} : vector<2x128xf32> to vector<2x32xf32>
    %55 = arith.negf %54 : vector<2x32xf32>
    %56 = math.exp %55 : vector<2x32xf32>
    %cst_23 = arith.constant 1.000000e+00 : f32
    %57 = vector.broadcast %cst_23 : f32 to vector<2x32xf32>
    %58 = arith.addf %57, %56 : vector<2x32xf32>
    %59 = arith.divf %57, %58 : vector<2x32xf32>
    %60 = vector.extract_strided_slice %53 {offsets = [0, 32], sizes = [2, 32], strides = [1, 1]} : vector<2x128xf32> to vector<2x32xf32>
    %61 = arith.negf %60 : vector<2x32xf32>
    %62 = math.exp %61 : vector<2x32xf32>
    %cst_24 = arith.constant 1.000000e+00 : f32
    %63 = vector.broadcast %cst_24 : f32 to vector<2x32xf32>
    %64 = arith.addf %63, %62 : vector<2x32xf32>
    %65 = arith.divf %63, %64 : vector<2x32xf32>
    %66 = vector.extract_strided_slice %53 {offsets = [0, 64], sizes = [2, 32], strides = [1, 1]} : vector<2x128xf32> to vector<2x32xf32>
    %67 = math.tanh %66 : vector<2x32xf32>
    %68 = vector.extract_strided_slice %53 {offsets = [0, 96], sizes = [2, 32], strides = [1, 1]} : vector<2x128xf32> to vector<2x32xf32>
    %69 = arith.negf %68 : vector<2x32xf32>
    %70 = math.exp %69 : vector<2x32xf32>
    %cst_25 = arith.constant 1.000000e+00 : f32
    %71 = vector.broadcast %cst_25 : f32 to vector<2x32xf32>
    %72 = arith.addf %71, %70 : vector<2x32xf32>
    %73 = arith.divf %71, %72 : vector<2x32xf32>
    %74 = arith.mulf %65, %38 : vector<2x32xf32>
    %75 = arith.mulf %59, %67 : vector<2x32xf32>
    %76 = arith.addf %74, %75 : vector<2x32xf32>
    %77 = math.tanh %76 : vector<2x32xf32>
    %78 = arith.mulf %73, %77 : vector<2x32xf32>
    %cst_26 = arith.constant dense<0.000000e+00> : vector<2x16xf32>
    %79 = tpu.matmul %78, %7, %cst_26 {dimension_numbers = #tpu.dot_dimension_numbers<[1], [0], [0], [1], [0, 0, 1, 1], [], []>} : vector<2x32xf32>, vector<32x16xf32>, vector<2x16xf32> -> vector<2x16xf32>
    %80 = vector.broadcast %8 : vector<1x16xf32> to vector<2x16xf32>
    %81 = arith.addf %79, %80 : vector<2x16xf32>
    %82 = vector.broadcast %9 : vector<1x32xf32> to vector<2x32xf32>
    %83 = arith.mulf %78, %82 : vector<2x32xf32>
    %cst_27 = arith.constant dense<0.000000e+00> : vector<2xf32>
    %84 = vector.multi_reduction <add>, %83, %cst_27 [1] : vector<2x32xf32> to vector<2xf32>
    %85 = vector.shape_cast %84 : vector<2xf32> to vector<2x1xf32>
    %86 = vector.broadcast %85 : vector<2x1xf32> to vector<2x16xf32>
    %87 = arith.mulf %81, %86 : vector<2x16xf32>
    %88 = arith.addf %50, %87 : vector<2x16xf32>
    %89 = vector.extract_strided_slice %5 {offsets = [4, 0], sizes = [2, 128], strides = [1, 1]} : vector<16x128xf32> to vector<2x128xf32>
    %cst_28 = arith.constant dense<0.000000e+00> : vector<2x128xf32>
    %90 = tpu.matmul %78, %6, %cst_28 {dimension_numbers = #tpu.dot_dimension_numbers<[1], [0], [0], [1], [0, 0, 1, 1], [], []>} : vector<2x32xf32>, vector<32x128xf32>, vector<2x128xf32> -> vector<2x128xf32>
    %91 = arith.addf %89, %90 : vector<2x128xf32>
    %92 = vector.extract_strided_slice %91 {offsets = [0, 0], sizes = [2, 32], strides = [1, 1]} : vector<2x128xf32> to vector<2x32xf32>
    %93 = arith.negf %92 : vector<2x32xf32>
    %94 = math.exp %93 : vector<2x32xf32>
    %cst_29 = arith.constant 1.000000e+00 : f32
    %95 = vector.broadcast %cst_29 : f32 to vector<2x32xf32>
    %96 = arith.addf %95, %94 : vector<2x32xf32>
    %97 = arith.divf %95, %96 : vector<2x32xf32>
    %98 = vector.extract_strided_slice %91 {offsets = [0, 32], sizes = [2, 32], strides = [1, 1]} : vector<2x128xf32> to vector<2x32xf32>
    %99 = arith.negf %98 : vector<2x32xf32>
    %100 = math.exp %99 : vector<2x32xf32>
    %cst_30 = arith.constant 1.000000e+00 : f32
    %101 = vector.broadcast %cst_30 : f32 to vector<2x32xf32>
    %102 = arith.addf %101, %100 : vector<2x32xf32>
    %103 = arith.divf %101, %102 : vector<2x32xf32>
    %104 = vector.extract_strided_slice %91 {offsets = [0, 64], sizes = [2, 32], strides = [1, 1]} : vector<2x128xf32> to vector<2x32xf32>
    %105 = math.tanh %104 : vector<2x32xf32>
    %106 = vector.extract_strided_slice %91 {offsets = [0, 96], sizes = [2, 32], strides = [1, 1]} : vector<2x128xf32> to vector<2x32xf32>
    %107 = arith.negf %106 : vector<2x32xf32>
    %108 = math.exp %107 : vector<2x32xf32>
    %cst_31 = arith.constant 1.000000e+00 : f32
    %109 = vector.broadcast %cst_31 : f32 to vector<2x32xf32>
    %110 = arith.addf %109, %108 : vector<2x32xf32>
    %111 = arith.divf %109, %110 : vector<2x32xf32>
    %112 = arith.mulf %103, %76 : vector<2x32xf32>
    %113 = arith.mulf %97, %105 : vector<2x32xf32>
    %114 = arith.addf %112, %113 : vector<2x32xf32>
    %115 = math.tanh %114 : vector<2x32xf32>
    %116 = arith.mulf %111, %115 : vector<2x32xf32>
    %cst_32 = arith.constant dense<0.000000e+00> : vector<2x16xf32>
    %117 = tpu.matmul %116, %7, %cst_32 {dimension_numbers = #tpu.dot_dimension_numbers<[1], [0], [0], [1], [0, 0, 1, 1], [], []>} : vector<2x32xf32>, vector<32x16xf32>, vector<2x16xf32> -> vector<2x16xf32>
    %118 = vector.broadcast %8 : vector<1x16xf32> to vector<2x16xf32>
    %119 = arith.addf %117, %118 : vector<2x16xf32>
    %120 = vector.broadcast %9 : vector<1x32xf32> to vector<2x32xf32>
    %121 = arith.mulf %116, %120 : vector<2x32xf32>
    %cst_33 = arith.constant dense<0.000000e+00> : vector<2xf32>
    %122 = vector.multi_reduction <add>, %121, %cst_33 [1] : vector<2x32xf32> to vector<2xf32>
    %123 = vector.shape_cast %122 : vector<2xf32> to vector<2x1xf32>
    %124 = vector.broadcast %123 : vector<2x1xf32> to vector<2x16xf32>
    %125 = arith.mulf %119, %124 : vector<2x16xf32>
    %126 = arith.addf %88, %125 : vector<2x16xf32>
    %127 = vector.extract_strided_slice %5 {offsets = [6, 0], sizes = [2, 128], strides = [1, 1]} : vector<16x128xf32> to vector<2x128xf32>
    %cst_34 = arith.constant dense<0.000000e+00> : vector<2x128xf32>
    %128 = tpu.matmul %116, %6, %cst_34 {dimension_numbers = #tpu.dot_dimension_numbers<[1], [0], [0], [1], [0, 0, 1, 1], [], []>} : vector<2x32xf32>, vector<32x128xf32>, vector<2x128xf32> -> vector<2x128xf32>
    %129 = arith.addf %127, %128 : vector<2x128xf32>
    %130 = vector.extract_strided_slice %129 {offsets = [0, 0], sizes = [2, 32], strides = [1, 1]} : vector<2x128xf32> to vector<2x32xf32>
    %131 = arith.negf %130 : vector<2x32xf32>
    %132 = math.exp %131 : vector<2x32xf32>
    %cst_35 = arith.constant 1.000000e+00 : f32
    %133 = vector.broadcast %cst_35 : f32 to vector<2x32xf32>
    %134 = arith.addf %133, %132 : vector<2x32xf32>
    %135 = arith.divf %133, %134 : vector<2x32xf32>
    %136 = vector.extract_strided_slice %129 {offsets = [0, 32], sizes = [2, 32], strides = [1, 1]} : vector<2x128xf32> to vector<2x32xf32>
    %137 = arith.negf %136 : vector<2x32xf32>
    %138 = math.exp %137 : vector<2x32xf32>
    %cst_36 = arith.constant 1.000000e+00 : f32
    %139 = vector.broadcast %cst_36 : f32 to vector<2x32xf32>
    %140 = arith.addf %139, %138 : vector<2x32xf32>
    %141 = arith.divf %139, %140 : vector<2x32xf32>
    %142 = vector.extract_strided_slice %129 {offsets = [0, 64], sizes = [2, 32], strides = [1, 1]} : vector<2x128xf32> to vector<2x32xf32>
    %143 = math.tanh %142 : vector<2x32xf32>
    %144 = vector.extract_strided_slice %129 {offsets = [0, 96], sizes = [2, 32], strides = [1, 1]} : vector<2x128xf32> to vector<2x32xf32>
    %145 = arith.negf %144 : vector<2x32xf32>
    %146 = math.exp %145 : vector<2x32xf32>
    %cst_37 = arith.constant 1.000000e+00 : f32
    %147 = vector.broadcast %cst_37 : f32 to vector<2x32xf32>
    %148 = arith.addf %147, %146 : vector<2x32xf32>
    %149 = arith.divf %147, %148 : vector<2x32xf32>
    %150 = arith.mulf %141, %114 : vector<2x32xf32>
    %151 = arith.mulf %135, %143 : vector<2x32xf32>
    %152 = arith.addf %150, %151 : vector<2x32xf32>
    %153 = math.tanh %152 : vector<2x32xf32>
    %154 = arith.mulf %149, %153 : vector<2x32xf32>
    %cst_38 = arith.constant dense<0.000000e+00> : vector<2x16xf32>
    %155 = tpu.matmul %154, %7, %cst_38 {dimension_numbers = #tpu.dot_dimension_numbers<[1], [0], [0], [1], [0, 0, 1, 1], [], []>} : vector<2x32xf32>, vector<32x16xf32>, vector<2x16xf32> -> vector<2x16xf32>
    %156 = vector.broadcast %8 : vector<1x16xf32> to vector<2x16xf32>
    %157 = arith.addf %155, %156 : vector<2x16xf32>
    %158 = vector.broadcast %9 : vector<1x32xf32> to vector<2x32xf32>
    %159 = arith.mulf %154, %158 : vector<2x32xf32>
    %cst_39 = arith.constant dense<0.000000e+00> : vector<2xf32>
    %160 = vector.multi_reduction <add>, %159, %cst_39 [1] : vector<2x32xf32> to vector<2xf32>
    %161 = vector.shape_cast %160 : vector<2xf32> to vector<2x1xf32>
    %162 = vector.broadcast %161 : vector<2x1xf32> to vector<2x16xf32>
    %163 = arith.mulf %157, %162 : vector<2x16xf32>
    %164 = arith.addf %126, %163 : vector<2x16xf32>
    %165 = vector.extract_strided_slice %5 {offsets = [8, 0], sizes = [2, 128], strides = [1, 1]} : vector<16x128xf32> to vector<2x128xf32>
    %cst_40 = arith.constant dense<0.000000e+00> : vector<2x128xf32>
    %166 = tpu.matmul %154, %6, %cst_40 {dimension_numbers = #tpu.dot_dimension_numbers<[1], [0], [0], [1], [0, 0, 1, 1], [], []>} : vector<2x32xf32>, vector<32x128xf32>, vector<2x128xf32> -> vector<2x128xf32>
    %167 = arith.addf %165, %166 : vector<2x128xf32>
    %168 = vector.extract_strided_slice %167 {offsets = [0, 0], sizes = [2, 32], strides = [1, 1]} : vector<2x128xf32> to vector<2x32xf32>
    %169 = arith.negf %168 : vector<2x32xf32>
    %170 = math.exp %169 : vector<2x32xf32>
    %cst_41 = arith.constant 1.000000e+00 : f32
    %171 = vector.broadcast %cst_41 : f32 to vector<2x32xf32>
    %172 = arith.addf %171, %170 : vector<2x32xf32>
    %173 = arith.divf %171, %172 : vector<2x32xf32>
    %174 = vector.extract_strided_slice %167 {offsets = [0, 32], sizes = [2, 32], strides = [1, 1]} : vector<2x128xf32> to vector<2x32xf32>
    %175 = arith.negf %174 : vector<2x32xf32>
    %176 = math.exp %175 : vector<2x32xf32>
    %cst_42 = arith.constant 1.000000e+00 : f32
    %177 = vector.broadcast %cst_42 : f32 to vector<2x32xf32>
    %178 = arith.addf %177, %176 : vector<2x32xf32>
    %179 = arith.divf %177, %178 : vector<2x32xf32>
    %180 = vector.extract_strided_slice %167 {offsets = [0, 64], sizes = [2, 32], strides = [1, 1]} : vector<2x128xf32> to vector<2x32xf32>
    %181 = math.tanh %180 : vector<2x32xf32>
    %182 = vector.extract_strided_slice %167 {offsets = [0, 96], sizes = [2, 32], strides = [1, 1]} : vector<2x128xf32> to vector<2x32xf32>
    %183 = arith.negf %182 : vector<2x32xf32>
    %184 = math.exp %183 : vector<2x32xf32>
    %cst_43 = arith.constant 1.000000e+00 : f32
    %185 = vector.broadcast %cst_43 : f32 to vector<2x32xf32>
    %186 = arith.addf %185, %184 : vector<2x32xf32>
    %187 = arith.divf %185, %186 : vector<2x32xf32>
    %188 = arith.mulf %179, %152 : vector<2x32xf32>
    %189 = arith.mulf %173, %181 : vector<2x32xf32>
    %190 = arith.addf %188, %189 : vector<2x32xf32>
    %191 = math.tanh %190 : vector<2x32xf32>
    %192 = arith.mulf %187, %191 : vector<2x32xf32>
    %cst_44 = arith.constant dense<0.000000e+00> : vector<2x16xf32>
    %193 = tpu.matmul %192, %7, %cst_44 {dimension_numbers = #tpu.dot_dimension_numbers<[1], [0], [0], [1], [0, 0, 1, 1], [], []>} : vector<2x32xf32>, vector<32x16xf32>, vector<2x16xf32> -> vector<2x16xf32>
    %194 = vector.broadcast %8 : vector<1x16xf32> to vector<2x16xf32>
    %195 = arith.addf %193, %194 : vector<2x16xf32>
    %196 = vector.broadcast %9 : vector<1x32xf32> to vector<2x32xf32>
    %197 = arith.mulf %192, %196 : vector<2x32xf32>
    %cst_45 = arith.constant dense<0.000000e+00> : vector<2xf32>
    %198 = vector.multi_reduction <add>, %197, %cst_45 [1] : vector<2x32xf32> to vector<2xf32>
    %199 = vector.shape_cast %198 : vector<2xf32> to vector<2x1xf32>
    %200 = vector.broadcast %199 : vector<2x1xf32> to vector<2x16xf32>
    %201 = arith.mulf %195, %200 : vector<2x16xf32>
    %202 = arith.addf %164, %201 : vector<2x16xf32>
    %203 = vector.extract_strided_slice %5 {offsets = [10, 0], sizes = [2, 128], strides = [1, 1]} : vector<16x128xf32> to vector<2x128xf32>
    %cst_46 = arith.constant dense<0.000000e+00> : vector<2x128xf32>
    %204 = tpu.matmul %192, %6, %cst_46 {dimension_numbers = #tpu.dot_dimension_numbers<[1], [0], [0], [1], [0, 0, 1, 1], [], []>} : vector<2x32xf32>, vector<32x128xf32>, vector<2x128xf32> -> vector<2x128xf32>
    %205 = arith.addf %203, %204 : vector<2x128xf32>
    %206 = vector.extract_strided_slice %205 {offsets = [0, 0], sizes = [2, 32], strides = [1, 1]} : vector<2x128xf32> to vector<2x32xf32>
    %207 = arith.negf %206 : vector<2x32xf32>
    %208 = math.exp %207 : vector<2x32xf32>
    %cst_47 = arith.constant 1.000000e+00 : f32
    %209 = vector.broadcast %cst_47 : f32 to vector<2x32xf32>
    %210 = arith.addf %209, %208 : vector<2x32xf32>
    %211 = arith.divf %209, %210 : vector<2x32xf32>
    %212 = vector.extract_strided_slice %205 {offsets = [0, 32], sizes = [2, 32], strides = [1, 1]} : vector<2x128xf32> to vector<2x32xf32>
    %213 = arith.negf %212 : vector<2x32xf32>
    %214 = math.exp %213 : vector<2x32xf32>
    %cst_48 = arith.constant 1.000000e+00 : f32
    %215 = vector.broadcast %cst_48 : f32 to vector<2x32xf32>
    %216 = arith.addf %215, %214 : vector<2x32xf32>
    %217 = arith.divf %215, %216 : vector<2x32xf32>
    %218 = vector.extract_strided_slice %205 {offsets = [0, 64], sizes = [2, 32], strides = [1, 1]} : vector<2x128xf32> to vector<2x32xf32>
    %219 = math.tanh %218 : vector<2x32xf32>
    %220 = vector.extract_strided_slice %205 {offsets = [0, 96], sizes = [2, 32], strides = [1, 1]} : vector<2x128xf32> to vector<2x32xf32>
    %221 = arith.negf %220 : vector<2x32xf32>
    %222 = math.exp %221 : vector<2x32xf32>
    %cst_49 = arith.constant 1.000000e+00 : f32
    %223 = vector.broadcast %cst_49 : f32 to vector<2x32xf32>
    %224 = arith.addf %223, %222 : vector<2x32xf32>
    %225 = arith.divf %223, %224 : vector<2x32xf32>
    %226 = arith.mulf %217, %190 : vector<2x32xf32>
    %227 = arith.mulf %211, %219 : vector<2x32xf32>
    %228 = arith.addf %226, %227 : vector<2x32xf32>
    %229 = math.tanh %228 : vector<2x32xf32>
    %230 = arith.mulf %225, %229 : vector<2x32xf32>
    %cst_50 = arith.constant dense<0.000000e+00> : vector<2x16xf32>
    %231 = tpu.matmul %230, %7, %cst_50 {dimension_numbers = #tpu.dot_dimension_numbers<[1], [0], [0], [1], [0, 0, 1, 1], [], []>} : vector<2x32xf32>, vector<32x16xf32>, vector<2x16xf32> -> vector<2x16xf32>
    %232 = vector.broadcast %8 : vector<1x16xf32> to vector<2x16xf32>
    %233 = arith.addf %231, %232 : vector<2x16xf32>
    %234 = vector.broadcast %9 : vector<1x32xf32> to vector<2x32xf32>
    %235 = arith.mulf %230, %234 : vector<2x32xf32>
    %cst_51 = arith.constant dense<0.000000e+00> : vector<2xf32>
    %236 = vector.multi_reduction <add>, %235, %cst_51 [1] : vector<2x32xf32> to vector<2xf32>
    %237 = vector.shape_cast %236 : vector<2xf32> to vector<2x1xf32>
    %238 = vector.broadcast %237 : vector<2x1xf32> to vector<2x16xf32>
    %239 = arith.mulf %233, %238 : vector<2x16xf32>
    %240 = arith.addf %202, %239 : vector<2x16xf32>
    %241 = vector.extract_strided_slice %5 {offsets = [12, 0], sizes = [2, 128], strides = [1, 1]} : vector<16x128xf32> to vector<2x128xf32>
    %cst_52 = arith.constant dense<0.000000e+00> : vector<2x128xf32>
    %242 = tpu.matmul %230, %6, %cst_52 {dimension_numbers = #tpu.dot_dimension_numbers<[1], [0], [0], [1], [0, 0, 1, 1], [], []>} : vector<2x32xf32>, vector<32x128xf32>, vector<2x128xf32> -> vector<2x128xf32>
    %243 = arith.addf %241, %242 : vector<2x128xf32>
    %244 = vector.extract_strided_slice %243 {offsets = [0, 0], sizes = [2, 32], strides = [1, 1]} : vector<2x128xf32> to vector<2x32xf32>
    %245 = arith.negf %244 : vector<2x32xf32>
    %246 = math.exp %245 : vector<2x32xf32>
    %cst_53 = arith.constant 1.000000e+00 : f32
    %247 = vector.broadcast %cst_53 : f32 to vector<2x32xf32>
    %248 = arith.addf %247, %246 : vector<2x32xf32>
    %249 = arith.divf %247, %248 : vector<2x32xf32>
    %250 = vector.extract_strided_slice %243 {offsets = [0, 32], sizes = [2, 32], strides = [1, 1]} : vector<2x128xf32> to vector<2x32xf32>
    %251 = arith.negf %250 : vector<2x32xf32>
    %252 = math.exp %251 : vector<2x32xf32>
    %cst_54 = arith.constant 1.000000e+00 : f32
    %253 = vector.broadcast %cst_54 : f32 to vector<2x32xf32>
    %254 = arith.addf %253, %252 : vector<2x32xf32>
    %255 = arith.divf %253, %254 : vector<2x32xf32>
    %256 = vector.extract_strided_slice %243 {offsets = [0, 64], sizes = [2, 32], strides = [1, 1]} : vector<2x128xf32> to vector<2x32xf32>
    %257 = math.tanh %256 : vector<2x32xf32>
    %258 = vector.extract_strided_slice %243 {offsets = [0, 96], sizes = [2, 32], strides = [1, 1]} : vector<2x128xf32> to vector<2x32xf32>
    %259 = arith.negf %258 : vector<2x32xf32>
    %260 = math.exp %259 : vector<2x32xf32>
    %cst_55 = arith.constant 1.000000e+00 : f32
    %261 = vector.broadcast %cst_55 : f32 to vector<2x32xf32>
    %262 = arith.addf %261, %260 : vector<2x32xf32>
    %263 = arith.divf %261, %262 : vector<2x32xf32>
    %264 = arith.mulf %255, %228 : vector<2x32xf32>
    %265 = arith.mulf %249, %257 : vector<2x32xf32>
    %266 = arith.addf %264, %265 : vector<2x32xf32>
    %267 = math.tanh %266 : vector<2x32xf32>
    %268 = arith.mulf %263, %267 : vector<2x32xf32>
    %cst_56 = arith.constant dense<0.000000e+00> : vector<2x16xf32>
    %269 = tpu.matmul %268, %7, %cst_56 {dimension_numbers = #tpu.dot_dimension_numbers<[1], [0], [0], [1], [0, 0, 1, 1], [], []>} : vector<2x32xf32>, vector<32x16xf32>, vector<2x16xf32> -> vector<2x16xf32>
    %270 = vector.broadcast %8 : vector<1x16xf32> to vector<2x16xf32>
    %271 = arith.addf %269, %270 : vector<2x16xf32>
    %272 = vector.broadcast %9 : vector<1x32xf32> to vector<2x32xf32>
    %273 = arith.mulf %268, %272 : vector<2x32xf32>
    %cst_57 = arith.constant dense<0.000000e+00> : vector<2xf32>
    %274 = vector.multi_reduction <add>, %273, %cst_57 [1] : vector<2x32xf32> to vector<2xf32>
    %275 = vector.shape_cast %274 : vector<2xf32> to vector<2x1xf32>
    %276 = vector.broadcast %275 : vector<2x1xf32> to vector<2x16xf32>
    %277 = arith.mulf %271, %276 : vector<2x16xf32>
    %278 = arith.addf %240, %277 : vector<2x16xf32>
    %279 = vector.extract_strided_slice %5 {offsets = [14, 0], sizes = [2, 128], strides = [1, 1]} : vector<16x128xf32> to vector<2x128xf32>
    %cst_58 = arith.constant dense<0.000000e+00> : vector<2x128xf32>
    %280 = tpu.matmul %268, %6, %cst_58 {dimension_numbers = #tpu.dot_dimension_numbers<[1], [0], [0], [1], [0, 0, 1, 1], [], []>} : vector<2x32xf32>, vector<32x128xf32>, vector<2x128xf32> -> vector<2x128xf32>
    %281 = arith.addf %279, %280 : vector<2x128xf32>
    %282 = vector.extract_strided_slice %281 {offsets = [0, 0], sizes = [2, 32], strides = [1, 1]} : vector<2x128xf32> to vector<2x32xf32>
    %283 = arith.negf %282 : vector<2x32xf32>
    %284 = math.exp %283 : vector<2x32xf32>
    %cst_59 = arith.constant 1.000000e+00 : f32
    %285 = vector.broadcast %cst_59 : f32 to vector<2x32xf32>
    %286 = arith.addf %285, %284 : vector<2x32xf32>
    %287 = arith.divf %285, %286 : vector<2x32xf32>
    %288 = vector.extract_strided_slice %281 {offsets = [0, 32], sizes = [2, 32], strides = [1, 1]} : vector<2x128xf32> to vector<2x32xf32>
    %289 = arith.negf %288 : vector<2x32xf32>
    %290 = math.exp %289 : vector<2x32xf32>
    %cst_60 = arith.constant 1.000000e+00 : f32
    %291 = vector.broadcast %cst_60 : f32 to vector<2x32xf32>
    %292 = arith.addf %291, %290 : vector<2x32xf32>
    %293 = arith.divf %291, %292 : vector<2x32xf32>
    %294 = vector.extract_strided_slice %281 {offsets = [0, 64], sizes = [2, 32], strides = [1, 1]} : vector<2x128xf32> to vector<2x32xf32>
    %295 = math.tanh %294 : vector<2x32xf32>
    %296 = vector.extract_strided_slice %281 {offsets = [0, 96], sizes = [2, 32], strides = [1, 1]} : vector<2x128xf32> to vector<2x32xf32>
    %297 = arith.negf %296 : vector<2x32xf32>
    %298 = math.exp %297 : vector<2x32xf32>
    %cst_61 = arith.constant 1.000000e+00 : f32
    %299 = vector.broadcast %cst_61 : f32 to vector<2x32xf32>
    %300 = arith.addf %299, %298 : vector<2x32xf32>
    %301 = arith.divf %299, %300 : vector<2x32xf32>
    %302 = arith.mulf %293, %266 : vector<2x32xf32>
    %303 = arith.mulf %287, %295 : vector<2x32xf32>
    %304 = arith.addf %302, %303 : vector<2x32xf32>
    %305 = math.tanh %304 : vector<2x32xf32>
    %306 = arith.mulf %301, %305 : vector<2x32xf32>
    %cst_62 = arith.constant dense<0.000000e+00> : vector<2x16xf32>
    %307 = tpu.matmul %306, %7, %cst_62 {dimension_numbers = #tpu.dot_dimension_numbers<[1], [0], [0], [1], [0, 0, 1, 1], [], []>} : vector<2x32xf32>, vector<32x16xf32>, vector<2x16xf32> -> vector<2x16xf32>
    %308 = vector.broadcast %8 : vector<1x16xf32> to vector<2x16xf32>
    %309 = arith.addf %307, %308 : vector<2x16xf32>
    %310 = vector.broadcast %9 : vector<1x32xf32> to vector<2x32xf32>
    %311 = arith.mulf %306, %310 : vector<2x32xf32>
    %cst_63 = arith.constant dense<0.000000e+00> : vector<2xf32>
    %312 = vector.multi_reduction <add>, %311, %cst_63 [1] : vector<2x32xf32> to vector<2xf32>
    %313 = vector.shape_cast %312 : vector<2xf32> to vector<2x1xf32>
    %314 = vector.broadcast %313 : vector<2x1xf32> to vector<2x16xf32>
    %315 = arith.mulf %309, %314 : vector<2x16xf32>
    %316 = arith.addf %278, %315 : vector<2x16xf32>
    %c0_64 = arith.constant 0 : index
    %c0_65 = arith.constant 0 : index
    %317 = vector.load %arg8[%c0_64, %c0_65] : memref<1x1xf32, #tpu.memory_space<vmem>>, vector<1x1xf32>
    %318 = vector.broadcast %317 : vector<1x1xf32> to vector<2x16xf32>
    %319 = arith.addf %316, %318 : vector<2x16xf32>
    %cst_66 = arith.constant 0.000000e+00 : f32
    %320 = vector.broadcast %cst_66 : f32 to vector<2x16xf32>
    %321 = arith.maximumf %319, %320 : vector<2x16xf32>
    %c0_67 = arith.constant 0 : index
    %c0_68 = arith.constant 0 : index
    %322 = vector.load %arg9[%c0_67, %c0_68] : memref<16x4xf32, #tpu.memory_space<vmem>>, vector<16x4xf32>
    %cst_69 = arith.constant dense<0.000000e+00> : vector<2x4xf32>
    %323 = tpu.matmul %321, %322, %cst_69 {dimension_numbers = #tpu.dot_dimension_numbers<[1], [0], [0], [1], [0, 0, 1, 1], [], []>} : vector<2x16xf32>, vector<16x4xf32>, vector<2x4xf32> -> vector<2x4xf32>
    %c0_70 = arith.constant 0 : index
    %c0_71 = arith.constant 0 : index
    %324 = vector.load %arg10[%c0_70, %c0_71] : memref<1x4xf32, #tpu.memory_space<vmem>>, vector<1x4xf32>
    %325 = vector.broadcast %324 : vector<1x4xf32> to vector<2x4xf32>
    %326 = arith.addf %323, %325 : vector<2x4xf32>
    %cst_72 = arith.constant 0.000000e+00 : f32
    %327 = vector.broadcast %cst_72 : f32 to vector<2x4xf32>
    %328 = arith.maximumf %326, %327 : vector<2x4xf32>
    %cst_73 = arith.constant dense<0xFF800000> : vector<2xf32>
    %329 = vector.multi_reduction <maximumf>, %328, %cst_73 [1] : vector<2x4xf32> to vector<2xf32>
    %330 = vector.shape_cast %329 : vector<2xf32> to vector<2x1xf32>
    %331 = vector.broadcast %330 : vector<2x1xf32> to vector<2x4xf32>
    %332 = arith.subf %328, %331 : vector<2x4xf32>
    %333 = math.exp %332 : vector<2x4xf32>
    %cst_74 = arith.constant dense<0.000000e+00> : vector<2xf32>
    %334 = vector.multi_reduction <add>, %333, %cst_74 [1] : vector<2x4xf32> to vector<2xf32>
    %335 = vector.shape_cast %334 : vector<2xf32> to vector<2x1xf32>
    %336 = vector.broadcast %335 : vector<2x1xf32> to vector<2x4xf32>
    %337 = arith.divf %333, %336 : vector<2x4xf32>
    %c0_75 = arith.constant 0 : index
    %c0_76 = arith.constant 0 : index
    %338 = vector.load %arg11[%c0_75, %c0_76] : memref<2x4xf32, #tpu.memory_space<vmem>>, vector<2x4xf32>
    tpu.vector_store %arg11[%c0_75, %c0_76], %337 {strides = array<i32>} : memref<2x4xf32, #tpu.memory_space<vmem>>, vector<2x4xf32>,
    return
  }
  func.func @transform_0(%arg0: i32) -> (i32, i32) {
    %c0_i32 = arith.constant 0 : i32
    %c0_i32_0 = arith.constant 0 : i32
    %c0_i32_1 = arith.constant 0 : i32
    return %c0_i32, %c0_i32_0 : i32, i32
  }
  func.func @transform_1(%arg0: i32) -> (i32, i32) {
    %c0_i32 = arith.constant 0 : i32
    %c0_i32_0 = arith.constant 0 : i32
    %c0_i32_1 = arith.constant 0 : i32
    return %c0_i32, %c0_i32_0 : i32, i32
  }
  func.func @transform_2(%arg0: i32) -> (i32, i32) {
    %c0_i32 = arith.constant 0 : i32
    %c0_i32_0 = arith.constant 0 : i32
    %c0_i32_1 = arith.constant 0 : i32
    return %c0_i32, %c0_i32_0 : i32, i32
  }
  func.func @transform_3(%arg0: i32) -> (i32, i32) {
    %c0_i32 = arith.constant 0 : i32
    %c0_i32_0 = arith.constant 0 : i32
    %c0_i32_1 = arith.constant 0 : i32
    return %c0_i32, %c0_i32_0 : i32, i32
  }
  func.func @transform_4(%arg0: i32) -> (i32, i32) {
    %c0_i32 = arith.constant 0 : i32
    %c0_i32_0 = arith.constant 0 : i32
    %c0_i32_1 = arith.constant 0 : i32
    return %c0_i32, %c0_i32_0 : i32, i32
  }
  func.func @transform_5(%arg0: i32) -> (i32, i32) {
    %c0_i32 = arith.constant 0 : i32
    %c0_i32_0 = arith.constant 0 : i32
    %c0_i32_1 = arith.constant 0 : i32
    return %c0_i32, %c0_i32_0 : i32, i32
  }
  func.func @transform_6(%arg0: i32) -> (i32, i32) {
    %c0_i32 = arith.constant 0 : i32
    %c0_i32_0 = arith.constant 0 : i32
    %c0_i32_1 = arith.constant 0 : i32
    return %c0_i32, %c0_i32_0 : i32, i32
  }
  func.func @transform_7(%arg0: i32) -> (i32, i32) {
    %c0_i32 = arith.constant 0 : i32
    %c0_i32_0 = arith.constant 0 : i32
    %c0_i32_1 = arith.constant 0 : i32
    return %c0_i32, %c0_i32_0 : i32, i32
  }
  func.func @transform_8(%arg0: i32) -> (i32, i32) {
    %c0_i32 = arith.constant 0 : i32
    %c0_i32_0 = arith.constant 0 : i32
    %c0_i32_1 = arith.constant 0 : i32
    return %c0_i32, %c0_i32_0 : i32, i32
  }
  func.func @transform_9(%arg0: i32) -> (i32, i32) {
    %c0_i32 = arith.constant 0 : i32
    %c0_i32_0 = arith.constant 0 : i32
    %c0_i32_1 = arith.constant 0 : i32
    return %c0_i32, %c0_i32_0 : i32, i32
  }
  func.func @transform_10(%arg0: i32) -> (i32, i32) {
    %c0_i32 = arith.constant 0 : i32
    %c0_i32_0 = arith.constant 0 : i32
    %c0_i32_1 = arith.constant 0 : i32
    return %c0_i32, %c0_i32_0 : i32, i32
  }
}

</mosaic_0001>

<llo_original>
// kernel: tpu_custom_call.1
$region0: #{tpu_custom_call.1}
  #allocation0 [shape = 'u32[]', space=smem, size = 0x4, offset = 0x4, fixed_abs, tag = 'smem constant byte address 0x4 - core index']
  #allocation1 [shape = 'u32[144,128]{1,0:T(1,128)}', space=vmem, size = 0x12000, scoped, tag = 'internal scratch']
  #allocation2 [shape = 'f32[1,1]{1,0:T(1,128)S(1)}', space=vmem, size = 0x200, scoped, tag = 'scoped memory for tpu_custom_call.1']
  %s0 = inlined_call_operand.hbm [shape: f32[16,32], index: 0, kind: input, shape index: {}]
  %s1 = inlined_call_operand.vmem [shape: f32[32,128], index: 1, kind: input, shape index: {}]
  %s2 = inlined_call_operand.vmem [shape: f32[32,128], index: 2, kind: input, shape index: {}]
  %s3 = inlined_call_operand.vmem [shape: f32[1,128], index: 3, kind: input, shape index: {}]
  %s4 = inlined_call_operand.vmem [shape: f32[32,16], index: 4, kind: input, shape index: {}]
  %s5 = inlined_call_operand.vmem [shape: f32[1,16], index: 5, kind: input, shape index: {}]
  %s6 = inlined_call_operand.vmem [shape: f32[1,32], index: 6, kind: input, shape index: {}]
  %s7 = inlined_call_operand.<no memory space> [shape: f32[1,1], index: 7, kind: input, shape index: {}]
  %s8 = inlined_call_operand.vmem [shape: f32[16,4], index: 8, kind: input, shape index: {}]
  %s9 = inlined_call_operand.vmem [shape: f32[1,4], index: 9, kind: input, shape index: {}]
  %s10 = inlined_call_operand.hbm [shape: f32[2,4], index: 10, kind: output, shape index: {}]
  %s11 = sld [smem:[#allocation0]]
  $region54: #{tpu_custom_call.1} parent=0
    _
  %s13 = ssub.s32 1, %s11
  %s14 = scalar_select 0, %s13, %s11
  %v15 = vstv %s7
  %16 = vst [vmem:[#allocation2] sm:$0x1] %v15
  $region1: #{tpu_custom_call.1} parent=0
    #allocation3 [shape = 'u8[8192]{0}', space=vmem, size = 0x2000, scoped, tag = 'input window, operand 0, single buffered']
    #allocation4 [shape = 's32[1]{0}', space=sflag, size = 0x4, scoped, tag = 'scoped memory for tpu_custom_call.1']
    #allocation5 [shape = 's32[1]{0}', space=sflag, size = 0x4, scoped, tag = 'scoped memory for tpu_custom_call.1']
    #allocation6 [shape = 'u8[1024]{0}', space=vmem, size = 0x400, scoped, tag = 'output window, operand 0, single buffered']
    %17 = vsyncpa [#allocation4], 0
    %18 = vsyncpa [#allocation5], 0
    // Predicated region
    $region2: #{tpu_custom_call.1} parent=1 // pred_check
      _
    $region3: #{tpu_custom_call.1} parent=1 // pred_check_branch
      %20 = sbr.rel (0) target = $region5
    $region4: #{tpu_custom_call.1} parent=1 // pred_region
      %s22 = ssub.s32 256, 256
      %23 = vsyncadd [#allocation4], %s22
      %s24 = sshll.u32 [#allocation3], 4
      %s25 = int_to_ptr.vmem [resolvable:$true] %s24
      %30 = dma.hbm_to_vmem [thread:$0]  %s0, 256, %s25, [#allocation4], 128, 128, 8
    $region5: #{tpu_custom_call.1} parent=1 // pred_fallthru
      _
    // Predicated region
    $region6: #{tpu_custom_call.1} parent=1 // pred_check
      _
    $region7: #{tpu_custom_call.1} parent=1 // pred_check_branch
      %32 = sbr.rel (0) target = $region9
    $region8: #{tpu_custom_call.1} parent=1 // pred_region
      _
    $region9: #{tpu_custom_call.1} parent=1 // pred_fallthru
      _
    // Predicated region
    $region10: #{tpu_custom_call.1} parent=1 // pred_check
      _
    $region11: #{tpu_custom_call.1} parent=1 // pred_check_branch
      %34 = sbr.rel (0) target = $region13
    $region12: #{tpu_custom_call.1} parent=1 // pred_region
      _
    $region13: #{tpu_custom_call.1} parent=1 // pred_fallthru
      _
    // Predicated region
    $region14: #{tpu_custom_call.1} parent=1 // pred_check
      _
    $region15: #{tpu_custom_call.1} parent=1 // pred_check_branch
      %36 = sbr.rel (0) target = $region17
    $region16: #{tpu_custom_call.1} parent=1 // pred_region
      _
    $region17: #{tpu_custom_call.1} parent=1 // pred_fallthru
      _
    // Predicated region
    $region18: #{tpu_custom_call.1} parent=1 // pred_check
      _
    $region19: #{tpu_custom_call.1} parent=1 // pred_check_branch
      %38 = sbr.rel (0) target = $region21
    $region20: #{tpu_custom_call.1} parent=1 // pred_region
      _
    $region21: #{tpu_custom_call.1} parent=1 // pred_fallthru
      _
    // Predicated region
    $region22: #{tpu_custom_call.1} parent=1 // pred_check
      _
    $region23: #{tpu_custom_call.1} parent=1 // pred_check_branch
      %40 = sbr.rel (0) target = $region25
    $region24: #{tpu_custom_call.1} parent=1 // pred_region
      _
    $region25: #{tpu_custom_call.1} parent=1 // pred_fallthru
      _
    // Predicated region
    $region26: #{tpu_custom_call.1} parent=1 // pred_check
      _
    $region27: #{tpu_custom_call.1} parent=1 // pred_check_branch
      %42 = sbr.rel (0) target = $region29
    $region28: #{tpu_custom_call.1} parent=1 // pred_region
      _
    $region29: #{tpu_custom_call.1} parent=1 // pred_fallthru
      _
    // Predicated region
    $region30: #{tpu_custom_call.1} parent=1 // pred_check
      _
    $region31: #{tpu_custom_call.1} parent=1 // pred_check_branch
      %44 = sbr.rel (0) target = $region33
    $region32: #{tpu_custom_call.1} parent=1 // pred_region
      _
    $region33: #{tpu_custom_call.1} parent=1 // pred_fallthru
      _
    // Predicated region
    $region34: #{tpu_custom_call.1} parent=1 // pred_check
      _
    $region35: #{tpu_custom_call.1} parent=1 // pred_check_branch
      %46 = sbr.rel (0) target = $region37
    $region36: #{tpu_custom_call.1} parent=1 // pred_region
      _
    $region37: #{tpu_custom_call.1} parent=1 // pred_fallthru
      _
    // Predicated region
    $region38: #{tpu_custom_call.1} parent=1 // pred_check
      _
    $region39: #{tpu_custom_call.1} parent=1 // pred_check_branch
      %48 = sbr.rel (0) target = $region41
    $region40: #{tpu_custom_call.1} parent=1 // pred_region
      _
    $region41: #{tpu_custom_call.1} parent=1 // pred_fallthru
      _
    // Predicated region
    $region42: #{tpu_custom_call.1} parent=1 // pred_check
      _
    $region43: #{tpu_custom_call.1} parent=1 // pred_check_branch
      %50 = sbr.rel (0) target = $region45
    $region44: #{tpu_custom_call.1} parent=1 // pred_region
      %51 = dma.done [#allocation4], 256
    $region45: #{tpu_custom_call.1} parent=1 // pred_fallthru
      _
    %v52 = vld [vmem:[#allocation3] sm:$0xff]
    %v53 = vld [vmem:[#allocation3 + $0x8] sm:$0xff]
    %v54 = vld [vmem:[%s1] sm:$0xff]
    %v55 = vld [vmem:[%s1 + $0x8] sm:$0xff]
    %v56 = vld [vmem:[%s1 + $0x10] sm:$0xff]
    %v57 = vld [vmem:[%s1 + $0x18] sm:$0xff]
    %v58 = vld [vmem:[%s3] sm:$0x1]
    %v60 = vlaneseq
    %v61 = vshrl.u32 %v60, 7
    %v62 = vsub.s32 0, %v61
    %v63 = vrot.slane %v58, %v62
    %vm65 = vcmask 261120
    %v67 = vsel %vm65, %v52, 0
    %v70 = vsel %vm65, %v53, 0
    %72 = vmatprep.subr.mxu0 0.0
    %73 = vmatpush1.msra.mxu0 %v54
    %74 = vmatprep.subr.mxu0 0.0
    %75 = vmatpush1.msra.mxu0 %v55
    %76 = vmatprep.subr.mxu0 0.0
    %77 = vmatpush1.msra.mxu0 %v56
    %78 = vmatprep.subr.mxu0 0.0
    %79 = vmatpush1.msra.mxu0 %v57
    %80 = vmatprep.subr.mxu0 0.0
    %81 = vmatpush1.msra.mxu0 0.0
    %82 = vmatprep.subr.mxu0 0.0
    %83 = vmatpush1.msra.mxu0 0.0
    %84 = vmatprep.subr.mxu0 0.0
    %85 = vmatpush1.msra.mxu0 0.0
    %86 = vmatprep.subr.mxu0 0.0
    %87 = vmatpush1.msra.mxu0 0.0
    %88 = vmatprep.subr.mxu0 0.0
    %89 = vmatpush1.msra.mxu0 0.0
    %90 = vmatprep.subr.mxu0 0.0
    %91 = vmatpush1.msra.mxu0 0.0
    %92 = vmatprep.subr.mxu0 0.0
    %93 = vmatpush1.msra.mxu0 0.0
    %94 = vmatprep.subr.mxu0 0.0
    %95 = vmatpush1.msra.mxu0 0.0
    %96 = vmatprep.subr.mxu0 0.0
    %97 = vmatpush1.msra.mxu0 0.0
    %98 = vmatprep.subr.mxu0 0.0
    %99 = vmatpush1.msra.mxu0 0.0
    %100 = vmatprep.subr.mxu0 0.0
    %101 = vmatpush1.msra.mxu0 0.0
    %102 = vmatprep.subr.mxu0 0.0
    %103 = vmatpush1.msra.mxu0 0.0
    %104 = vmatprep.subr.mxu0 0.0
    %105 = vmatpush1.msra.mxu0 0.0
    %106 = vmatprep.subr.mxu0 0.0
    %107 = vmatpush1.msra.mxu0 0.0
    %108 = vmatprep.subr.mxu0 0.0
    %109 = vmatpush1.msra.mxu0 0.0
    %110 = vmatprep.subr.mxu0 0.0
    %111 = vmatpush1.msra.mxu0 0.0
    %112 = vmatprep.subr.mxu0 0.0
    %113 = vmatpush1.msra.mxu0 0.0
    %114 = vmatprep.subr.mxu0 0.0
    %115 = vmatpush1.msra.mxu0 0.0
    %116 = vmatprep.subr.mxu0 0.0
    %117 = vmatpush1.msra.mxu0 0.0
    %118 = vmatprep.subr.mxu0 0.0
    %119 = vmatpush1.msra.mxu0 0.0
    %120 = vmatprep.subr.mxu0 0.0
    %121 = vmatpush1.msra.mxu0 0.0
    %122 = vmatprep.subr.mxu0 0.0
    %123 = vmatpush1.msra.mxu0 0.0
    %124 = vmatprep.subr.mxu0 0.0
    %125 = vmatpush1.msra.mxu0 0.0
    %126 = vmatprep.subr.mxu0 0.0
    %127 = vmatpush1.msra.mxu0 0.0
    %128 = vmatprep.subr.mxu0 0.0
    %129 = vmatpush1.msra.mxu0 0.0
    %130 = vmatprep.subr.mxu0 0.0
    %131 = vmatpush1.msra.mxu0 0.0
    %132 = vmatprep.subr.mxu0 0.0
    %133 = vmatpush1.msra.mxu0 0.0
    %134 = vmatprep.subr.mxu0 0.0
    %135 = vmatpush1.msra.mxu0 0.0
    %136 = vmatprep.mubr.f32.mxu0 0.0
    %137 = vmatmul.mubr.f32.gmra.mrb[0].mxu0 %v67
    %v138 = vpop.f32.mrb[0].mxu0
    %v139 = vadd.f32 %v63, %v138
    %v140 = vpop.f32.mrb[0].mxu0
    %141 = vmatprep.mubr.f32.mxu0 0.0
    %142 = vmatmul.mubr.f32.gmra.mrb[0].mxu0 %v70
    %v143 = vpop.f32.mrb[0].mxu0
    %v144 = vadd.f32 %v63, %v143
    %v145 = vpop.f32.mrb[0].mxu0
    %146 = vdwg.mxu0
    %v147 = vld [vmem:[%s2] sm:$0xff]
    %v148 = vld [vmem:[%s2 + $0x8] sm:$0xff]
    %v149 = vld [vmem:[%s2 + $0x10] sm:$0xff]
    %v150 = vld [vmem:[%s2 + $0x18] sm:$0xff]
    %v151 = vld [vmem:[%s4] sm:$0xff]
    %v152 = vld [vmem:[%s4 + $0x8] sm:$0xff]
    %v153 = vld [vmem:[%s4 + $0x10] sm:$0xff]
    %v154 = vld [vmem:[%s4 + $0x18] sm:$0xff]
    %v155 = vld [vmem:[%s5] sm:$0x1]
    %v156 = vld [vmem:[%s6] sm:$0x1]
    %v158 = vsel %vm65, 0.0, 0
    %160 = vmatprep.subr.mxu0 0.0
    %161 = vmatpush1.msra.mxu0 %v147
    %162 = vmatprep.subr.mxu0 0.0
    %163 = vmatpush1.msra.mxu0 %v148
    %164 = vmatprep.subr.mxu0 0.0
    %165 = vmatpush1.msra.mxu0 %v149
    %166 = vmatprep.subr.mxu0 0.0
    %167 = vmatpush1.msra.mxu0 %v150
    %168 = vmatprep.subr.mxu0 0.0
    %169 = vmatpush1.msra.mxu0 0.0
    %170 = vmatprep.subr.mxu0 0.0
    %171 = vmatpush1.msra.mxu0 0.0
    %172 = vmatprep.subr.mxu0 0.0
    %173 = vmatpush1.msra.mxu0 0.0
    %174 = vmatprep.subr.mxu0 0.0
    %175 = vmatpush1.msra.mxu0 0.0
    %176 = vmatprep.subr.mxu0 0.0
    %177 = vmatpush1.msra.mxu0 0.0
    %178 = vmatprep.subr.mxu0 0.0
    %179 = vmatpush1.msra.mxu0 0.0
    %180 = vmatprep.subr.mxu0 0.0
    %181 = vmatpush1.msra.mxu0 0.0
    %182 = vmatprep.subr.mxu0 0.0
    %183 = vmatpush1.msra.mxu0 0.0
    %184 = vmatprep.subr.mxu0 0.0
    %185 = vmatpush1.msra.mxu0 0.0
    %186 = vmatprep.subr.mxu0 0.0
    %187 = vmatpush1.msra.mxu0 0.0
    %188 = vmatprep.subr.mxu0 0.0
    %189 = vmatpush1.msra.mxu0 0.0
    %190 = vmatprep.subr.mxu0 0.0
    %191 = vmatpush1.msra.mxu0 0.0
    %192 = vmatprep.subr.mxu0 0.0
    %193 = vmatpush1.msra.mxu0 0.0
    %194 = vmatprep.subr.mxu0 0.0
    %195 = vmatpush1.msra.mxu0 0.0
    %196 = vmatprep.subr.mxu0 0.0
    %197 = vmatpush1.msra.mxu0 0.0
    %198 = vmatprep.subr.mxu0 0.0
    %199 = vmatpush1.msra.mxu0 0.0
    %200 = vmatprep.subr.mxu0 0.0
    %201 = vmatpush1.msra.mxu0 0.0
    %202 = vmatprep.subr.mxu0 0.0
    %203 = vmatpush1.msra.mxu0 0.0
    %204 = vmatprep.subr.mxu0 0.0
    %205 = vmatpush1.msra.mxu0 0.0
    %206 = vmatprep.subr.mxu0 0.0
    %207 = vmatpush1.msra.mxu0 0.0
    %208 = vmatprep.subr.mxu0 0.0
    %209 = vmatpush1.msra.mxu0 0.0
    %210 = vmatprep.subr.mxu0 0.0
    %211 = vmatpush1.msra.mxu0 0.0
    %212 = vmatprep.subr.mxu0 0.0
    %213 = vmatpush1.msra.mxu0 0.0
    %214 = vmatprep.subr.mxu0 0.0
    %215 = vmatpush1.msra.mxu0 0.0
    %216 = vmatprep.subr.mxu0 0.0
    %217 = vmatpush1.msra.mxu0 0.0
    %218 = vmatprep.subr.mxu0 0.0
    %219 = vmatpush1.msra.mxu0 0.0
    %220 = vmatprep.subr.mxu0 0.0
    %221 = vmatpush1.msra.mxu0 0.0
    %222 = vmatprep.subr.mxu0 0.0
    %223 = vmatpush1.msra.mxu0 0.0
    %224 = vmatprep.mubr.f32.mxu0 0.0
    %225 = vmatmul.mubr.f32.gmra.mrb[0].mxu0 %v158
    %v226 = vpop.f32.mrb[0].mxu0
    %v227 = vadd.f32 0.0, %v226
    %v228 = vpop.f32.mrb[0].mxu0
    %229 = vdwg.mxu0
    %v230 = vadd.f32 %v139, %v227
    %v231 = vxor.u32 %v230, 2147483648
    %v232 = vmul.f32 %v231, 1.442695
    %v233 = vpow.pop %v232
    %v234 = vadd.f32 %v233, 1.0
    %v235 = vrcp.pop %v234
    %v236 = vmul.f32 1.0, %v235
    %v237 = vtanh.pop %v230
    %v238 = vmul.f32 %v236, 0.0
    %240 = vrot.lane.b32.xlu0 %v237, 64
    %v241 = vpop.permute.xlu0 %240
    %v243 = vmul.f32 %v236, %v241
    %245 = vrot.lane.b32.xlu0 %v243, 32
    %v246 = vpop.permute.xlu0 %245
    %v248 = vadd.f32 %v238, %v246
    %v249 = vtanh.pop %v248
    %251 = vrot.lane.b32.xlu0 %v249, 64
    %v252 = vpop.permute.xlu0 %251
    %v254 = vmul.f32 %v236, %v252
    %v256 = vlaneseq
    %v257 = vshrl.u32 %v256, 7
    %v258 = vsub.s32 0, %v257
    %v259 = vrot.slane %v155, %v258
    %262 = vrot.lane.b32.xlu0 %v254, 32
    %v263 = vpop.permute.xlu0 %262
    %v264 = vsel %vm65, %v263, 0
    %266 = vmatprep.subr.mxu0 0.0
    %267 = vmatpush1.msra.mxu0 %v151
    %268 = vmatprep.subr.mxu0 0.0
    %269 = vmatpush1.msra.mxu0 %v152
    %270 = vmatprep.subr.mxu0 0.0
    %271 = vmatpush1.msra.mxu0 %v153
    %272 = vmatprep.subr.mxu0 0.0
    %273 = vmatpush1.msra.mxu0 %v154
    %274 = vmatprep.subr.mxu0 0.0
    %275 = vmatpush1.msra.mxu0 0.0
    %276 = vmatprep.subr.mxu0 0.0
    %277 = vmatpush1.msra.mxu0 0.0
    %278 = vmatprep.subr.mxu0 0.0
    %279 = vmatpush1.msra.mxu0 0.0
    %280 = vmatprep.subr.mxu0 0.0
    %281 = vmatpush1.msra.mxu0 0.0
    %282 = vmatprep.subr.mxu0 0.0
    %283 = vmatpush1.msra.mxu0 0.0
    %284 = vmatprep.subr.mxu0 0.0
    %285 = vmatpush1.msra.mxu0 0.0
    %286 = vmatprep.subr.mxu0 0.0
    %287 = vmatpush1.msra.mxu0 0.0
    %288 = vmatprep.subr.mxu0 0.0
    %289 = vmatpush1.msra.mxu0 0.0
    %290 = vmatprep.subr.mxu0 0.0
    %291 = vmatpush1.msra.mxu0 0.0
    %292 = vmatprep.subr.mxu0 0.0
    %293 = vmatpush1.msra.mxu0 0.0
    %294 = vmatprep.subr.mxu0 0.0
    %295 = vmatpush1.msra.mxu0 0.0
    %296 = vmatprep.subr.mxu0 0.0
    %297 = vmatpush1.msra.mxu0 0.0
    %298 = vmatprep.subr.mxu0 0.0
    %299 = vmatpush1.msra.mxu0 0.0
    %300 = vmatprep.subr.mxu0 0.0
    %301 = vmatpush1.msra.mxu0 0.0
    %302 = vmatprep.subr.mxu0 0.0
    %303 = vmatpush1.msra.mxu0 0.0
    %304 = vmatprep.subr.mxu0 0.0
    %305 = vmatpush1.msra.mxu0 0.0
    %306 = vmatprep.subr.mxu0 0.0
    %307 = vmatpush1.msra.mxu0 0.0
    %308 = vmatprep.subr.mxu0 0.0
    %309 = vmatpush1.msra.mxu0 0.0
    %310 = vmatprep.subr.mxu0 0.0
    %311 = vmatpush1.msra.mxu0 0.0
    %312 = vmatprep.subr.mxu0 0.0
    %313 = vmatpush1.msra.mxu0 0.0
    %314 = vmatprep.subr.mxu0 0.0
    %315 = vmatpush1.msra.mxu0 0.0
    %316 = vmatprep.subr.mxu0 0.0
    %317 = vmatpush1.msra.mxu0 0.0
    %318 = vmatprep.subr.mxu0 0.0
    %319 = vmatpush1.msra.mxu0 0.0
    %320 = vmatprep.subr.mxu0 0.0
    %321 = vmatpush1.msra.mxu0 0.0
    %322 = vmatprep.subr.mxu0 0.0
    %323 = vmatpush1.msra.mxu0 0.0
    %324 = vmatprep.subr.mxu0 0.0
    %325 = vmatpush1.msra.mxu0 0.0
    %326 = vmatprep.subr.mxu0 0.0
    %327 = vmatpush1.msra.mxu0 0.0
    %328 = vmatprep.subr.mxu0 0.0
    %329 = vmatpush1.msra.mxu0 0.0
    %330 = vmatprep.mubr.f32.mxu0 0.0
    %331 = vmatmul.mubr.f32.gmra.mrb[0].mxu0 %v264
    %v332 = vpop.f32.mrb[0].mxu0
    %v333 = vadd.f32 %v259, %v332
    %v334 = vpop.f32.mrb[0].mxu0
    %335 = vdwg.mxu0
    %v337 = vlaneseq
    %v338 = vshrl.u32 %v337, 7
    %v339 = vsub.s32 0, %v338
    %v340 = vrot.slane %v156, %v339
    %341 = vrot.lane.b32.xlu0 %v340, 96
    %v342 = vpop.permute.xlu0 %341
    %v344 = vmul.f32 %v254, %v342
    %346 = vrot.lane.b32.xlu0 %v344, 32
    %v347 = vpop.permute.xlu0 %346
    %vm349 = vcmask 254976
    %v350 = vsel %vm349, %v347, 0.0
    %351 = vadd.xlane.f32.xlu0 %v350
    %v352 = vpop.xlane.xlu0 %351
    %v353 = vmul.f32 %v333, %v352
    %v354 = vadd.f32 %v353, 0.0
    %355 = vmatprep.subr.mxu0 0.0
    %356 = vmatpush1.msra.mxu0 %v147
    %357 = vmatprep.subr.mxu0 0.0
    %358 = vmatpush1.msra.mxu0 %v148
    %359 = vmatprep.subr.mxu0 0.0
    %360 = vmatpush1.msra.mxu0 %v149
    %361 = vmatprep.subr.mxu0 0.0
    %362 = vmatpush1.msra.mxu0 %v150
    %363 = vmatprep.subr.mxu0 0.0
    %364 = vmatpush1.msra.mxu0 0.0
    %365 = vmatprep.subr.mxu0 0.0
    %366 = vmatpush1.msra.mxu0 0.0
    %367 = vmatprep.subr.mxu0 0.0
    %368 = vmatpush1.msra.mxu0 0.0
    %369 = vmatprep.subr.mxu0 0.0
    %370 = vmatpush1.msra.mxu0 0.0
    %371 = vmatprep.subr.mxu0 0.0
    %372 = vmatpush1.msra.mxu0 0.0
    %373 = vmatprep.subr.mxu0 0.0
    %374 = vmatpush1.msra.mxu0 0.0
    %375 = vmatprep.subr.mxu0 0.0
    %376 = vmatpush1.msra.mxu0 0.0
    %377 = vmatprep.subr.mxu0 0.0
    %378 = vmatpush1.msra.mxu0 0.0
    %379 = vmatprep.subr.mxu0 0.0
    %380 = vmatpush1.msra.mxu0 0.0
    %381 = vmatprep.subr.mxu0 0.0
    %382 = vmatpush1.msra.mxu0 0.0
    %383 = vmatprep.subr.mxu0 0.0
    %384 = vmatpush1.msra.mxu0 0.0
    %385 = vmatprep.subr.mxu0 0.0
    %386 = vmatpush1.msra.mxu0 0.0
    %387 = vmatprep.subr.mxu0 0.0
    %388 = vmatpush1.msra.mxu0 0.0
    %389 = vmatprep.subr.mxu0 0.0
    %390 = vmatpush1.msra.mxu0 0.0
    %391 = vmatprep.subr.mxu0 0.0
    %392 = vmatpush1.msra.mxu0 0.0
    %393 = vmatprep.subr.mxu0 0.0
    %394 = vmatpush1.msra.mxu0 0.0
    %395 = vmatprep.subr.mxu0 0.0
    %396 = vmatpush1.msra.mxu0 0.0
    %397 = vmatprep.subr.mxu0 0.0
    %398 = vmatpush1.msra.mxu0 0.0
    %399 = vmatprep.subr.mxu0 0.0
    %400 = vmatpush1.msra.mxu0 0.0
    %401 = vmatprep.subr.mxu0 0.0
    %402 = vmatpush1.msra.mxu0 0.0
    %403 = vmatprep.subr.mxu0 0.0
    %404 = vmatpush1.msra.mxu0 0.0
    %405 = vmatprep.subr.mxu0 0.0
    %406 = vmatpush1.msra.mxu0 0.0
    %407 = vmatprep.subr.mxu0 0.0
    %408 = vmatpush1.msra.mxu0 0.0
    %409 = vmatprep.subr.mxu0 0.0
    %410 = vmatpush1.msra.mxu0 0.0
    %411 = vmatprep.subr.mxu0 0.0
    %412 = vmatpush1.msra.mxu0 0.0
    %413 = vmatprep.subr.mxu0 0.0
    %414 = vmatpush1.msra.mxu0 0.0
    %415 = vmatprep.subr.mxu0 0.0
    %416 = vmatpush1.msra.mxu0 0.0
    %417 = vmatprep.subr.mxu0 0.0
    %418 = vmatpush1.msra.mxu0 0.0
    %419 = vmatprep.mubr.f32.mxu0 0.0
    %420 = vmatmul.mubr.f32.gmra.mrb[0].mxu0 %v264
    %v421 = vpop.f32.mrb[0].mxu0
    %v422 = vadd.f32 0.0, %v421
    %v423 = vpop.f32.mrb[0].mxu0
    %424 = vdwg.mxu0
    %v426 = vrot.slane %v422, 6
    %v428 = vadd.f32 %v139, %v426
    %v429 = vxor.u32 %v428, 2147483648
    %v430 = vmul.f32 %v429, 1.442695
    %v431 = vpow.pop %v430
    %v432 = vadd.f32 %v431, 1.0
    %v433 = vrcp.pop %v432
    %v434 = vmul.f32 1.0, %v433
    %v435 = vtanh.pop %v428
    %v437 = vrot.slane %v248, 6
    %v439 = vmul.f32 %v434, %v437
    %441 = vrot.lane.b32.xlu0 %v435, 64
    %v442 = vpop.permute.xlu0 %441
    %v444 = vmul.f32 %v434, %v442
    %446 = vrot.lane.b32.xlu0 %v444, 32
    %v447 = vpop.permute.xlu0 %446
    %v449 = vadd.f32 %v439, %v447
    %v450 = vtanh.pop %v449
    %452 = vrot.lane.b32.xlu0 %v450, 64
    %v453 = vpop.permute.xlu0 %452
    %v455 = vmul.f32 %v434, %v453
    %v457 = vrot.slane %v455, 2
    %458 = vrot.lane.b32.xlu0 %v457, 32
    %v459 = vpop.permute.xlu0 %458
    %v460 = vsel %vm65, %v459, 0
    %462 = vmatprep.subr.mxu0 0.0
    %463 = vmatpush1.msra.mxu0 %v151
    %464 = vmatprep.subr.mxu0 0.0
    %465 = vmatpush1.msra.mxu0 %v152
    %466 = vmatprep.subr.mxu0 0.0
    %467 = vmatpush1.msra.mxu0 %v153
    %468 = vmatprep.subr.mxu0 0.0
    %469 = vmatpush1.msra.mxu0 %v154
    %470 = vmatprep.subr.mxu0 0.0
    %471 = vmatpush1.msra.mxu0 0.0
    %472 = vmatprep.subr.mxu0 0.0
    %473 = vmatpush1.msra.mxu0 0.0
    %474 = vmatprep.subr.mxu0 0.0
    %475 = vmatpush1.msra.mxu0 0.0
    %476 = vmatprep.subr.mxu0 0.0
    %477 = vmatpush1.msra.mxu0 0.0
    %478 = vmatprep.subr.mxu0 0.0
    %479 = vmatpush1.msra.mxu0 0.0
    %480 = vmatprep.subr.mxu0 0.0
    %481 = vmatpush1.msra.mxu0 0.0
    %482 = vmatprep.subr.mxu0 0.0
    %483 = vmatpush1.msra.mxu0 0.0
    %484 = vmatprep.subr.mxu0 0.0
    %485 = vmatpush1.msra.mxu0 0.0
    %486 = vmatprep.subr.mxu0 0.0
    %487 = vmatpush1.msra.mxu0 0.0
    %488 = vmatprep.subr.mxu0 0.0
    %489 = vmatpush1.msra.mxu0 0.0
    %490 = vmatprep.subr.mxu0 0.0
    %491 = vmatpush1.msra.mxu0 0.0
    %492 = vmatprep.subr.mxu0 0.0
    %493 = vmatpush1.msra.mxu0 0.0
    %494 = vmatprep.subr.mxu0 0.0
    %495 = vmatpush1.msra.mxu0 0.0
    %496 = vmatprep.subr.mxu0 0.0
    %497 = vmatpush1.msra.mxu0 0.0
    %498 = vmatprep.subr.mxu0 0.0
    %499 = vmatpush1.msra.mxu0 0.0
    %500 = vmatprep.subr.mxu0 0.0
    %501 = vmatpush1.msra.mxu0 0.0
    %502 = vmatprep.subr.mxu0 0.0
    %503 = vmatpush1.msra.mxu0 0.0
    %504 = vmatprep.subr.mxu0 0.0
    %505 = vmatpush1.msra.mxu0 0.0
    %506 = vmatprep.subr.mxu0 0.0
    %507 = vmatpush1.msra.mxu0 0.0
    %508 = vmatprep.subr.mxu0 0.0
    %509 = vmatpush1.msra.mxu0 0.0
    %510 = vmatprep.subr.mxu0 0.0
    %511 = vmatpush1.msra.mxu0 0.0
    %512 = vmatprep.subr.mxu0 0.0
    %513 = vmatpush1.msra.mxu0 0.0
    %514 = vmatprep.subr.mxu0 0.0
    %515 = vmatpush1.msra.mxu0 0.0
    %516 = vmatprep.subr.mxu0 0.0
    %517 = vmatpush1.msra.mxu0 0.0
    %518 = vmatprep.subr.mxu0 0.0
    %519 = vmatpush1.msra.mxu0 0.0
    %520 = vmatprep.subr.mxu0 0.0
    %521 = vmatpush1.msra.mxu0 0.0
    %522 = vmatprep.subr.mxu0 0.0
    %523 = vmatpush1.msra.mxu0 0.0
    %524 = vmatprep.subr.mxu0 0.0
    %525 = vmatpush1.msra.mxu0 0.0
    %526 = vmatprep.mubr.f32.mxu0 0.0
    %527 = vmatmul.mubr.f32.gmra.mrb[0].mxu0 %v460
    %v528 = vpop.f32.mrb[0].mxu0
    %v529 = vadd.f32 %v259, %v528
    %v530 = vpop.f32.mrb[0].mxu0
    %531 = vdwg.mxu0
    %v532 = vmul.f32 %v455, %v342
    %534 = vrot.lane.b32.xlu0 %v532, 32
    %v535 = vpop.permute.xlu0 %534
    %vm537 = vcmask 257026
    %v538 = vsel %vm537, %v535, 0.0
    %539 = vadd.xlane.f32.xlu0 %v538
    %v540 = vpop.xlane.xlu0 %539
    %v542 = vrot.slane %v540, 2
    %v544 = vmul.f32 %v529, %v542
    %v545 = vadd.f32 %v354, %v544
    %546 = vmatprep.subr.mxu0 0.0
    %547 = vmatpush1.msra.mxu0 %v147
    %548 = vmatprep.subr.mxu0 0.0
    %549 = vmatpush1.msra.mxu0 %v148
    %550 = vmatprep.subr.mxu0 0.0
    %551 = vmatpush1.msra.mxu0 %v149
    %552 = vmatprep.subr.mxu0 0.0
    %553 = vmatpush1.msra.mxu0 %v150
    %554 = vmatprep.subr.mxu0 0.0
    %555 = vmatpush1.msra.mxu0 0.0
    %556 = vmatprep.subr.mxu0 0.0
    %557 = vmatpush1.msra.mxu0 0.0
    %558 = vmatprep.subr.mxu0 0.0
    %559 = vmatpush1.msra.mxu0 0.0
    %560 = vmatprep.subr.mxu0 0.0
    %561 = vmatpush1.msra.mxu0 0.0
    %562 = vmatprep.subr.mxu0 0.0
    %563 = vmatpush1.msra.mxu0 0.0
    %564 = vmatprep.subr.mxu0 0.0
    %565 = vmatpush1.msra.mxu0 0.0
    %566 = vmatprep.subr.mxu0 0.0
    %567 = vmatpush1.msra.mxu0 0.0
    %568 = vmatprep.subr.mxu0 0.0
    %569 = vmatpush1.msra.mxu0 0.0
    %570 = vmatprep.subr.mxu0 0.0
    %571 = vmatpush1.msra.mxu0 0.0
    %572 = vmatprep.subr.mxu0 0.0
    %573 = vmatpush1.msra.mxu0 0.0
    %574 = vmatprep.subr.mxu0 0.0
    %575 = vmatpush1.msra.mxu0 0.0
    %576 = vmatprep.subr.mxu0 0.0
    %577 = vmatpush1.msra.mxu0 0.0
    %578 = vmatprep.subr.mxu0 0.0
    %579 = vmatpush1.msra.mxu0 0.0
    %580 = vmatprep.subr.mxu0 0.0
    %581 = vmatpush1.msra.mxu0 0.0
    %582 = vmatprep.subr.mxu0 0.0
    %583 = vmatpush1.msra.mxu0 0.0
    %584 = vmatprep.subr.mxu0 0.0
    %585 = vmatpush1.msra.mxu0 0.0
    %586 = vmatprep.subr.mxu0 0.0
    %587 = vmatpush1.msra.mxu0 0.0
    %588 = vmatprep.subr.mxu0 0.0
    %589 = vmatpush1.msra.mxu0 0.0
    %590 = vmatprep.subr.mxu0 0.0
    %591 = vmatpush1.msra.mxu0 0.0
    %592 = vmatprep.subr.mxu0 0.0
    %593 = vmatpush1.msra.mxu0 0.0
    %594 = vmatprep.subr.mxu0 0.0
    %595 = vmatpush1.msra.mxu0 0.0
    %596 = vmatprep.subr.mxu0 0.0
    %597 = vmatpush1.msra.mxu0 0.0
    %598 = vmatprep.subr.mxu0 0.0
    %599 = vmatpush1.msra.mxu0 0.0
    %600 = vmatprep.subr.mxu0 0.0
    %601 = vmatpush1.msra.mxu0 0.0
    %602 = vmatprep.subr.mxu0 0.0
    %603 = vmatpush1.msra.mxu0 0.0
    %604 = vmatprep.subr.mxu0 0.0
    %605 = vmatpush1.msra.mxu0 0.0
    %606 = vmatprep.subr.mxu0 0.0
    %607 = vmatpush1.msra.mxu0 0.0
    %608 = vmatprep.subr.mxu0 0.0
    %609 = vmatpush1.msra.mxu0 0.0
    %610 = vmatprep.mubr.f32.mxu0 0.0
    %611 = vmatmul.mubr.f32.gmra.mrb[0].mxu0 %v460
    %v612 = vpop.f32.mrb[0].mxu0
    %v613 = vadd.f32 0.0, %v612
    %v614 = vpop.f32.mrb[0].mxu0
    %615 = vdwg.mxu0
    %v617 = vrot.slane %v613, 4
    %v619 = vadd.f32 %v139, %v617
    %v620 = vxor.u32 %v619, 2147483648
    %v621 = vmul.f32 %v620, 1.442695
    %v622 = vpow.pop %v621
    %v623 = vadd.f32 %v622, 1.0
    %v624 = vrcp.pop %v623
    %v625 = vmul.f32 1.0, %v624
    %v626 = vtanh.pop %v619
    %v628 = vrot.slane %v449, 6
    %v630 = vmul.f32 %v625, %v628
    %632 = vrot.lane.b32.xlu0 %v626, 64
    %v633 = vpop.permute.xlu0 %632
    %v635 = vmul.f32 %v625, %v633
    %637 = vrot.lane.b32.xlu0 %v635, 32
    %v638 = vpop.permute.xlu0 %637
    %v640 = vadd.f32 %v630, %v638
    %v641 = vtanh.pop %v640
    %643 = vrot.lane.b32.xlu0 %v641, 64
    %v644 = vpop.permute.xlu0 %643
    %v646 = vmul.f32 %v625, %v644
    %v648 = vrot.slane %v646, 4
    %649 = vrot.lane.b32.xlu0 %v648, 32
    %v650 = vpop.permute.xlu0 %649
    %v651 = vsel %vm65, %v650, 0
    %653 = vmatprep.subr.mxu0 0.0
    %654 = vmatpush1.msra.mxu0 %v151
    %655 = vmatprep.subr.mxu0 0.0
    %656 = vmatpush1.msra.mxu0 %v152
    %657 = vmatprep.subr.mxu0 0.0
    %658 = vmatpush1.msra.mxu0 %v153
    %659 = vmatprep.subr.mxu0 0.0
    %660 = vmatpush1.msra.mxu0 %v154
    %661 = vmatprep.subr.mxu0 0.0
    %662 = vmatpush1.msra.mxu0 0.0
    %663 = vmatprep.subr.mxu0 0.0
    %664 = vmatpush1.msra.mxu0 0.0
    %665 = vmatprep.subr.mxu0 0.0
    %666 = vmatpush1.msra.mxu0 0.0
    %667 = vmatprep.subr.mxu0 0.0
    %668 = vmatpush1.msra.mxu0 0.0
    %669 = vmatprep.subr.mxu0 0.0
    %670 = vmatpush1.msra.mxu0 0.0
    %671 = vmatprep.subr.mxu0 0.0
    %672 = vmatpush1.msra.mxu0 0.0
    %673 = vmatprep.subr.mxu0 0.0
    %674 = vmatpush1.msra.mxu0 0.0
    %675 = vmatprep.subr.mxu0 0.0
    %676 = vmatpush1.msra.mxu0 0.0
    %677 = vmatprep.subr.mxu0 0.0
    %678 = vmatpush1.msra.mxu0 0.0
    %679 = vmatprep.subr.mxu0 0.0
    %680 = vmatpush1.msra.mxu0 0.0
    %681 = vmatprep.subr.mxu0 0.0
    %682 = vmatpush1.msra.mxu0 0.0
    %683 = vmatprep.subr.mxu0 0.0
    %684 = vmatpush1.msra.mxu0 0.0
    %685 = vmatprep.subr.mxu0 0.0
    %686 = vmatpush1.msra.mxu0 0.0
    %687 = vmatprep.subr.mxu0 0.0
    %688 = vmatpush1.msra.mxu0 0.0
    %689 = vmatprep.subr.mxu0 0.0
    %690 = vmatpush1.msra.mxu0 0.0
    %691 = vmatprep.subr.mxu0 0.0
    %692 = vmatpush1.msra.mxu0 0.0
    %693 = vmatprep.subr.mxu0 0.0
    %694 = vmatpush1.msra.mxu0 0.0
    %695 = vmatprep.subr.mxu0 0.0
    %696 = vmatpush1.msra.mxu0 0.0
    %697 = vmatprep.subr.mxu0 0.0
    %698 = vmatpush1.msra.mxu0 0.0
    %699 = vmatprep.subr.mxu0 0.0
    %700 = vmatpush1.msra.mxu0 0.0
    %701 = vmatprep.subr.mxu0 0.0
    %702 = vmatpush1.msra.mxu0 0.0
    %703 = vmatprep.subr.mxu0 0.0
    %704 = vmatpush1.msra.mxu0 0.0
    %705 = vmatprep.subr.mxu0 0.0
    %706 = vmatpush1.msra.mxu0 0.0
    %707 = vmatprep.subr.mxu0 0.0
    %708 = vmatpush1.msra.mxu0 0.0
    %709 = vmatprep.subr.mxu0 0.0
    %710 = vmatpush1.msra.mxu0 0.0
    %711 = vmatprep.subr.mxu0 0.0
    %712 = vmatpush1.msra.mxu0 0.0
    %713 = vmatprep.subr.mxu0 0.0
    %714 = vmatpush1.msra.mxu0 0.0
    %715 = vmatprep.subr.mxu0 0.0
    %716 = vmatpush1.msra.mxu0 0.0
    %717 = vmatprep.mubr.f32.mxu0 0.0
    %718 = vmatmul.mubr.f32.gmra.mrb[0].mxu0 %v651
    %v719 = vpop.f32.mrb[0].mxu0
    %v720 = vadd.f32 %v259, %v719
    %v721 = vpop.f32.mrb[0].mxu0
    %722 = vdwg.mxu0
    %v723 = vmul.f32 %v646, %v342
    %725 = vrot.lane.b32.xlu0 %v723, 32
    %v726 = vpop.permute.xlu0 %725
    %vm728 = vcmask 259076
    %v729 = vsel %vm728, %v726, 0.0
    %730 = vadd.xlane.f32.xlu0 %v729
    %v731 = vpop.xlane.xlu0 %730
    %v733 = vrot.slane %v731, 4
    %v735 = vmul.f32 %v720, %v733
    %v736 = vadd.f32 %v545, %v735
    %737 = vmatprep.subr.mxu0 0.0
    %738 = vmatpush1.msra.mxu0 %v147
    %739 = vmatprep.subr.mxu0 0.0
    %740 = vmatpush1.msra.mxu0 %v148
    %741 = vmatprep.subr.mxu0 0.0
    %742 = vmatpush1.msra.mxu0 %v149
    %743 = vmatprep.subr.mxu0 0.0
    %744 = vmatpush1.msra.mxu0 %v150
    %745 = vmatprep.subr.mxu0 0.0
    %746 = vmatpush1.msra.mxu0 0.0
    %747 = vmatprep.subr.mxu0 0.0
    %748 = vmatpush1.msra.mxu0 0.0
    %749 = vmatprep.subr.mxu0 0.0
    %750 = vmatpush1.msra.mxu0 0.0
    %751 = vmatprep.subr.mxu0 0.0
    %752 = vmatpush1.msra.mxu0 0.0
    %753 = vmatprep.subr.mxu0 0.0
    %754 = vmatpush1.msra.mxu0 0.0
    %755 = vmatprep.subr.mxu0 0.0
    %756 = vmatpush1.msra.mxu0 0.0
    %757 = vmatprep.subr.mxu0 0.0
    %758 = vmatpush1.msra.mxu0 0.0
    %759 = vmatprep.subr.mxu0 0.0
    %760 = vmatpush1.msra.mxu0 0.0
    %761 = vmatprep.subr.mxu0 0.0
    %762 = vmatpush1.msra.mxu0 0.0
    %763 = vmatprep.subr.mxu0 0.0
    %764 = vmatpush1.msra.mxu0 0.0
    %765 = vmatprep.subr.mxu0 0.0
    %766 = vmatpush1.msra.mxu0 0.0
    %767 = vmatprep.subr.mxu0 0.0
    %768 = vmatpush1.msra.mxu0 0.0
    %769 = vmatprep.subr.mxu0 0.0
    %770 = vmatpush1.msra.mxu0 0.0
    %771 = vmatprep.subr.mxu0 0.0
    %772 = vmatpush1.msra.mxu0 0.0
    %773 = vmatprep.subr.mxu0 0.0
    %774 = vmatpush1.msra.mxu0 0.0
    %775 = vmatprep.subr.mxu0 0.0
    %776 = vmatpush1.msra.mxu0 0.0
    %777 = vmatprep.subr.mxu0 0.0
    %778 = vmatpush1.msra.mxu0 0.0
    %779 = vmatprep.subr.mxu0 0.0
    %780 = vmatpush1.msra.mxu0 0.0
    %781 = vmatprep.subr.mxu0 0.0
    %782 = vmatpush1.msra.mxu0 0.0
    %783 = vmatprep.subr.mxu0 0.0
    %784 = vmatpush1.msra.mxu0 0.0
    %785 = vmatprep.subr.mxu0 0.0
    %786 = vmatpush1.msra.mxu0 0.0
    %787 = vmatprep.subr.mxu0 0.0
    %788 = vmatpush1.msra.mxu0 0.0
    %789 = vmatprep.subr.mxu0 0.0
    %790 = vmatpush1.msra.mxu0 0.0
    %791 = vmatprep.subr.mxu0 0.0
    %792 = vmatpush1.msra.mxu0 0.0
    %793 = vmatprep.subr.mxu0 0.0
    %794 = vmatpush1.msra.mxu0 0.0
    %795 = vmatprep.subr.mxu0 0.0
    %796 = vmatpush1.msra.mxu0 0.0
    %797 = vmatprep.subr.mxu0 0.0
    %798 = vmatpush1.msra.mxu0 0.0
    %799 = vmatprep.subr.mxu0 0.0
    %800 = vmatpush1.msra.mxu0 0.0
    %801 = vmatprep.mubr.f32.mxu0 0.0
    %802 = vmatmul.mubr.f32.gmra.mrb[0].mxu0 %v651
    %v803 = vpop.f32.mrb[0].mxu0
    %v804 = vadd.f32 0.0, %v803
    %v805 = vpop.f32.mrb[0].mxu0
    %806 = vdwg.mxu0
    %v808 = vrot.slane %v804, 2
    %v810 = vadd.f32 %v139, %v808
    %v811 = vxor.u32 %v810, 2147483648
    %v812 = vmul.f32 %v811, 1.442695
    %v813 = vpow.pop %v812
    %v814 = vadd.f32 %v813, 1.0
    %v815 = vrcp.pop %v814
    %v816 = vmul.f32 1.0, %v815
    %v817 = vtanh.pop %v810
    %v819 = vrot.slane %v640, 6
    %v821 = vmul.f32 %v816, %v819
    %823 = vrot.lane.b32.xlu0 %v817, 64
    %v824 = vpop.permute.xlu0 %823
    %v826 = vmul.f32 %v816, %v824
    %828 = vrot.lane.b32.xlu0 %v826, 32
    %v829 = vpop.permute.xlu0 %828
    %v831 = vadd.f32 %v821, %v829
    %v832 = vtanh.pop %v831
    %834 = vrot.lane.b32.xlu0 %v832, 64
    %v835 = vpop.permute.xlu0 %834
    %v837 = vmul.f32 %v816, %v835
    %v839 = vrot.slane %v837, 6
    %840 = vrot.lane.b32.xlu0 %v839, 32
    %v841 = vpop.permute.xlu0 %840
    %v842 = vsel %vm65, %v841, 0
    %844 = vmatprep.subr.mxu0 0.0
    %845 = vmatpush1.msra.mxu0 %v151
    %846 = vmatprep.subr.mxu0 0.0
    %847 = vmatpush1.msra.mxu0 %v152
    %848 = vmatprep.subr.mxu0 0.0
    %849 = vmatpush1.msra.mxu0 %v153
    %850 = vmatprep.subr.mxu0 0.0
    %851 = vmatpush1.msra.mxu0 %v154
    %852 = vmatprep.subr.mxu0 0.0
    %853 = vmatpush1.msra.mxu0 0.0
    %854 = vmatprep.subr.mxu0 0.0
    %855 = vmatpush1.msra.mxu0 0.0
    %856 = vmatprep.subr.mxu0 0.0
    %857 = vmatpush1.msra.mxu0 0.0
    %858 = vmatprep.subr.mxu0 0.0
    %859 = vmatpush1.msra.mxu0 0.0
    %860 = vmatprep.subr.mxu0 0.0
    %861 = vmatpush1.msra.mxu0 0.0
    %862 = vmatprep.subr.mxu0 0.0
    %863 = vmatpush1.msra.mxu0 0.0
    %864 = vmatprep.subr.mxu0 0.0
    %865 = vmatpush1.msra.mxu0 0.0
    %866 = vmatprep.subr.mxu0 0.0
    %867 = vmatpush1.msra.mxu0 0.0
    %868 = vmatprep.subr.mxu0 0.0
    %869 = vmatpush1.msra.mxu0 0.0
    %870 = vmatprep.subr.mxu0 0.0
    %871 = vmatpush1.msra.mxu0 0.0
    %872 = vmatprep.subr.mxu0 0.0
    %873 = vmatpush1.msra.mxu0 0.0
    %874 = vmatprep.subr.mxu0 0.0
    %875 = vmatpush1.msra.mxu0 0.0
    %876 = vmatprep.subr.mxu0 0.0
    %877 = vmatpush1.msra.mxu0 0.0
    %878 = vmatprep.subr.mxu0 0.0
    %879 = vmatpush1.msra.mxu0 0.0
    %880 = vmatprep.subr.mxu0 0.0
    %881 = vmatpush1.msra.mxu0 0.0
    %882 = vmatprep.subr.mxu0 0.0
    %883 = vmatpush1.msra.mxu0 0.0
    %884 = vmatprep.subr.mxu0 0.0
    %885 = vmatpush1.msra.mxu0 0.0
    %886 = vmatprep.subr.mxu0 0.0
    %887 = vmatpush1.msra.mxu0 0.0
    %888 = vmatprep.subr.mxu0 0.0
    %889 = vmatpush1.msra.mxu0 0.0
    %890 = vmatprep.subr.mxu0 0.0
    %891 = vmatpush1.msra.mxu0 0.0
    %892 = vmatprep.subr.mxu0 0.0
    %893 = vmatpush1.msra.mxu0 0.0
    %894 = vmatprep.subr.mxu0 0.0
    %895 = vmatpush1.msra.mxu0 0.0
    %896 = vmatprep.subr.mxu0 0.0
    %897 = vmatpush1.msra.mxu0 0.0
    %898 = vmatprep.subr.mxu0 0.0
    %899 = vmatpush1.msra.mxu0 0.0
    %900 = vmatprep.subr.mxu0 0.0
    %901 = vmatpush1.msra.mxu0 0.0
    %902 = vmatprep.subr.mxu0 0.0
    %903 = vmatpush1.msra.mxu0 0.0
    %904 = vmatprep.subr.mxu0 0.0
    %905 = vmatpush1.msra.mxu0 0.0
    %906 = vmatprep.subr.mxu0 0.0
    %907 = vmatpush1.msra.mxu0 0.0
    %908 = vmatprep.mubr.f32.mxu0 0.0
    %909 = vmatmul.mubr.f32.gmra.mrb[0].mxu0 %v842
    %v910 = vpop.f32.mrb[0].mxu0
    %v911 = vadd.f32 %v259, %v910
    %v912 = vpop.f32.mrb[0].mxu0
    %913 = vdwg.mxu0
    %v914 = vmul.f32 %v837, %v342
    %916 = vrot.lane.b32.xlu0 %v914, 32
    %v917 = vpop.permute.xlu0 %916
    %vm919 = vcmask 261126
    %v920 = vsel %vm919, %v917, 0.0
    %921 = vadd.xlane.f32.xlu0 %v920
    %v922 = vpop.xlane.xlu0 %921
    %v924 = vrot.slane %v922, 6
    %v926 = vmul.f32 %v911, %v924
    %v927 = vadd.f32 %v736, %v926
    %928 = vmatprep.subr.mxu0 0.0
    %929 = vmatpush1.msra.mxu0 %v147
    %930 = vmatprep.subr.mxu0 0.0
    %931 = vmatpush1.msra.mxu0 %v148
    %932 = vmatprep.subr.mxu0 0.0
    %933 = vmatpush1.msra.mxu0 %v149
    %934 = vmatprep.subr.mxu0 0.0
    %935 = vmatpush1.msra.mxu0 %v150
    %936 = vmatprep.subr.mxu0 0.0
    %937 = vmatpush1.msra.mxu0 0.0
    %938 = vmatprep.subr.mxu0 0.0
    %939 = vmatpush1.msra.mxu0 0.0
    %940 = vmatprep.subr.mxu0 0.0
    %941 = vmatpush1.msra.mxu0 0.0
    %942 = vmatprep.subr.mxu0 0.0
    %943 = vmatpush1.msra.mxu0 0.0
    %944 = vmatprep.subr.mxu0 0.0
    %945 = vmatpush1.msra.mxu0 0.0
    %946 = vmatprep.subr.mxu0 0.0
    %947 = vmatpush1.msra.mxu0 0.0
    %948 = vmatprep.subr.mxu0 0.0
    %949 = vmatpush1.msra.mxu0 0.0
    %950 = vmatprep.subr.mxu0 0.0
    %951 = vmatpush1.msra.mxu0 0.0
    %952 = vmatprep.subr.mxu0 0.0
    %953 = vmatpush1.msra.mxu0 0.0
    %954 = vmatprep.subr.mxu0 0.0
    %955 = vmatpush1.msra.mxu0 0.0
    %956 = vmatprep.subr.mxu0 0.0
    %957 = vmatpush1.msra.mxu0 0.0
    %958 = vmatprep.subr.mxu0 0.0
    %959 = vmatpush1.msra.mxu0 0.0
    %960 = vmatprep.subr.mxu0 0.0
    %961 = vmatpush1.msra.mxu0 0.0
    %962 = vmatprep.subr.mxu0 0.0
    %963 = vmatpush1.msra.mxu0 0.0
    %964 = vmatprep.subr.mxu0 0.0
    %965 = vmatpush1.msra.mxu0 0.0
    %966 = vmatprep.subr.mxu0 0.0
    %967 = vmatpush1.msra.mxu0 0.0
    %968 = vmatprep.subr.mxu0 0.0
    %969 = vmatpush1.msra.mxu0 0.0
    %970 = vmatprep.subr.mxu0 0.0
    %971 = vmatpush1.msra.mxu0 0.0
    %972 = vmatprep.subr.mxu0 0.0
    %973 = vmatpush1.msra.mxu0 0.0
    %974 = vmatprep.subr.mxu0 0.0
    %975 = vmatpush1.msra.mxu0 0.0
    %976 = vmatprep.subr.mxu0 0.0
    %977 = vmatpush1.msra.mxu0 0.0
    %978 = vmatprep.subr.mxu0 0.0
    %979 = vmatpush1.msra.mxu0 0.0
    %980 = vmatprep.subr.mxu0 0.0
    %981 = vmatpush1.msra.mxu0 0.0
    %982 = vmatprep.subr.mxu0 0.0
    %983 = vmatpush1.msra.mxu0 0.0
    %984 = vmatprep.subr.mxu0 0.0
    %985 = vmatpush1.msra.mxu0 0.0
    %986 = vmatprep.subr.mxu0 0.0
    %987 = vmatpush1.msra.mxu0 0.0
    %988 = vmatprep.subr.mxu0 0.0
    %989 = vmatpush1.msra.mxu0 0.0
    %990 = vmatprep.subr.mxu0 0.0
    %991 = vmatpush1.msra.mxu0 0.0
    %992 = vmatprep.mubr.f32.mxu0 0.0
    %993 = vmatmul.mubr.f32.gmra.mrb[0].mxu0 %v842
    %v994 = vpop.f32.mrb[0].mxu0
    %v995 = vadd.f32 0.0, %v994
    %v996 = vpop.f32.mrb[0].mxu0
    %997 = vdwg.mxu0
    %v998 = vadd.f32 %v144, %v995
    %v999 = vxor.u32 %v998, 2147483648
    %v1000 = vmul.f32 %v999, 1.442695
    %v1001 = vpow.pop %v1000
    %v1002 = vadd.f32 %v1001, 1.0
    %v1003 = vrcp.pop %v1002
    %v1004 = vmul.f32 1.0, %v1003
    %v1005 = vtanh.pop %v998
    %v1007 = vrot.slane %v831, 6
    %v1009 = vmul.f32 %v1004, %v1007
    %1011 = vrot.lane.b32.xlu0 %v1005, 64
    %v1012 = vpop.permute.xlu0 %1011
    %v1014 = vmul.f32 %v1004, %v1012
    %1016 = vrot.lane.b32.xlu0 %v1014, 32
    %v1017 = vpop.permute.xlu0 %1016
    %v1019 = vadd.f32 %v1009, %v1017
    %v1020 = vtanh.pop %v1019
    %1022 = vrot.lane.b32.xlu0 %v1020, 64
    %v1023 = vpop.permute.xlu0 %1022
    %v1025 = vmul.f32 %v1004, %v1023
    %1027 = vrot.lane.b32.xlu0 %v1025, 32
    %v1028 = vpop.permute.xlu0 %1027
    %v1029 = vsel %vm65, %v1028, 0
    %1031 = vmatprep.subr.mxu0 0.0
    %1032 = vmatpush1.msra.mxu0 %v151
    %1033 = vmatprep.subr.mxu0 0.0
    %1034 = vmatpush1.msra.mxu0 %v152
    %1035 = vmatprep.subr.mxu0 0.0
    %1036 = vmatpush1.msra.mxu0 %v153
    %1037 = vmatprep.subr.mxu0 0.0
    %1038 = vmatpush1.msra.mxu0 %v154
    %1039 = vmatprep.subr.mxu0 0.0
    %1040 = vmatpush1.msra.mxu0 0.0
    %1041 = vmatprep.subr.mxu0 0.0
    %1042 = vmatpush1.msra.mxu0 0.0
    %1043 = vmatprep.subr.mxu0 0.0
    %1044 = vmatpush1.msra.mxu0 0.0
    %1045 = vmatprep.subr.mxu0 0.0
    %1046 = vmatpush1.msra.mxu0 0.0
    %1047 = vmatprep.subr.mxu0 0.0
    %1048 = vmatpush1.msra.mxu0 0.0
    %1049 = vmatprep.subr.mxu0 0.0
    %1050 = vmatpush1.msra.mxu0 0.0
    %1051 = vmatprep.subr.mxu0 0.0
    %1052 = vmatpush1.msra.mxu0 0.0
    %1053 = vmatprep.subr.mxu0 0.0
    %1054 = vmatpush1.msra.mxu0 0.0
    %1055 = vmatprep.subr.mxu0 0.0
    %1056 = vmatpush1.msra.mxu0 0.0
    %1057 = vmatprep.subr.mxu0 0.0
    %1058 = vmatpush1.msra.mxu0 0.0
    %1059 = vmatprep.subr.mxu0 0.0
    %1060 = vmatpush1.msra.mxu0 0.0
    %1061 = vmatprep.subr.mxu0 0.0
    %1062 = vmatpush1.msra.mxu0 0.0
    %1063 = vmatprep.subr.mxu0 0.0
    %1064 = vmatpush1.msra.mxu0 0.0
    %1065 = vmatprep.subr.mxu0 0.0
    %1066 = vmatpush1.msra.mxu0 0.0
    %1067 = vmatprep.subr.mxu0 0.0
    %1068 = vmatpush1.msra.mxu0 0.0
    %1069 = vmatprep.subr.mxu0 0.0
    %1070 = vmatpush1.msra.mxu0 0.0
    %1071 = vmatprep.subr.mxu0 0.0
    %1072 = vmatpush1.msra.mxu0 0.0
    %1073 = vmatprep.subr.mxu0 0.0
    %1074 = vmatpush1.msra.mxu0 0.0
    %1075 = vmatprep.subr.mxu0 0.0
    %1076 = vmatpush1.msra.mxu0 0.0
    %1077 = vmatprep.subr.mxu0 0.0
    %1078 = vmatpush1.msra.mxu0 0.0
    %1079 = vmatprep.subr.mxu0 0.0
    %1080 = vmatpush1.msra.mxu0 0.0
    %1081 = vmatprep.subr.mxu0 0.0
    %1082 = vmatpush1.msra.mxu0 0.0
    %1083 = vmatprep.subr.mxu0 0.0
    %1084 = vmatpush1.msra.mxu0 0.0
    %1085 = vmatprep.subr.mxu0 0.0
    %1086 = vmatpush1.msra.mxu0 0.0
    %1087 = vmatprep.subr.mxu0 0.0
    %1088 = vmatpush1.msra.mxu0 0.0
    %1089 = vmatprep.subr.mxu0 0.0
    %1090 = vmatpush1.msra.mxu0 0.0
    %1091 = vmatprep.subr.mxu0 0.0
    %1092 = vmatpush1.msra.mxu0 0.0
    %1093 = vmatprep.subr.mxu0 0.0
    %1094 = vmatpush1.msra.mxu0 0.0
    %1095 = vmatprep.mubr.f32.mxu0 0.0
    %1096 = vmatmul.mubr.f32.gmra.mrb[0].mxu0 %v1029
    %v1097 = vpop.f32.mrb[0].mxu0
    %v1098 = vadd.f32 %v259, %v1097
    %v1099 = vpop.f32.mrb[0].mxu0
    %1100 = vdwg.mxu0
    %v1101 = vmul.f32 %v1025, %v342
    %1103 = vrot.lane.b32.xlu0 %v1101, 32
    %v1104 = vpop.permute.xlu0 %1103
    %v1106 = vsel %vm349, %v1104, 0.0
    %1107 = vadd.xlane.f32.xlu0 %v1106
    %v1108 = vpop.xlane.xlu0 %1107
    %v1109 = vmul.f32 %v1098, %v1108
    %v1110 = vadd.f32 %v927, %v1109
    %1111 = vmatprep.subr.mxu0 0.0
    %1112 = vmatpush1.msra.mxu0 %v147
    %1113 = vmatprep.subr.mxu0 0.0
    %1114 = vmatpush1.msra.mxu0 %v148
    %1115 = vmatprep.subr.mxu0 0.0
    %1116 = vmatpush1.msra.mxu0 %v149
    %1117 = vmatprep.subr.mxu0 0.0
    %1118 = vmatpush1.msra.mxu0 %v150
    %1119 = vmatprep.subr.mxu0 0.0
    %1120 = vmatpush1.msra.mxu0 0.0
    %1121 = vmatprep.subr.mxu0 0.0
    %1122 = vmatpush1.msra.mxu0 0.0
    %1123 = vmatprep.subr.mxu0 0.0
    %1124 = vmatpush1.msra.mxu0 0.0
    %1125 = vmatprep.subr.mxu0 0.0
    %1126 = vmatpush1.msra.mxu0 0.0
    %1127 = vmatprep.subr.mxu0 0.0
    %1128 = vmatpush1.msra.mxu0 0.0
    %1129 = vmatprep.subr.mxu0 0.0
    %1130 = vmatpush1.msra.mxu0 0.0
    %1131 = vmatprep.subr.mxu0 0.0
    %1132 = vmatpush1.msra.mxu0 0.0
    %1133 = vmatprep.subr.mxu0 0.0
    %1134 = vmatpush1.msra.mxu0 0.0
    %1135 = vmatprep.subr.mxu0 0.0
    %1136 = vmatpush1.msra.mxu0 0.0
    %1137 = vmatprep.subr.mxu0 0.0
    %1138 = vmatpush1.msra.mxu0 0.0
    %1139 = vmatprep.subr.mxu0 0.0
    %1140 = vmatpush1.msra.mxu0 0.0
    %1141 = vmatprep.subr.mxu0 0.0
    %1142 = vmatpush1.msra.mxu0 0.0
    %1143 = vmatprep.subr.mxu0 0.0
    %1144 = vmatpush1.msra.mxu0 0.0
    %1145 = vmatprep.subr.mxu0 0.0
    %1146 = vmatpush1.msra.mxu0 0.0
    %1147 = vmatprep.subr.mxu0 0.0
    %1148 = vmatpush1.msra.mxu0 0.0
    %1149 = vmatprep.subr.mxu0 0.0
    %1150 = vmatpush1.msra.mxu0 0.0
    %1151 = vmatprep.subr.mxu0 0.0
    %1152 = vmatpush1.msra.mxu0 0.0
    %1153 = vmatprep.subr.mxu0 0.0
    %1154 = vmatpush1.msra.mxu0 0.0
    %1155 = vmatprep.subr.mxu0 0.0
    %1156 = vmatpush1.msra.mxu0 0.0
    %1157 = vmatprep.subr.mxu0 0.0
    %1158 = vmatpush1.msra.mxu0 0.0
    %1159 = vmatprep.subr.mxu0 0.0
    %1160 = vmatpush1.msra.mxu0 0.0
    %1161 = vmatprep.subr.mxu0 0.0
    %1162 = vmatpush1.msra.mxu0 0.0
    %1163 = vmatprep.subr.mxu0 0.0
    %1164 = vmatpush1.msra.mxu0 0.0
    %1165 = vmatprep.subr.mxu0 0.0
    %1166 = vmatpush1.msra.mxu0 0.0
    %1167 = vmatprep.subr.mxu0 0.0
    %1168 = vmatpush1.msra.mxu0 0.0
    %1169 = vmatprep.subr.mxu0 0.0
    %1170 = vmatpush1.msra.mxu0 0.0
    %1171 = vmatprep.subr.mxu0 0.0
    %1172 = vmatpush1.msra.mxu0 0.0
    %1173 = vmatprep.subr.mxu0 0.0
    %1174 = vmatpush1.msra.mxu0 0.0
    %1175 = vmatprep.mubr.f32.mxu0 0.0
    %1176 = vmatmul.mubr.f32.gmra.mrb[0].mxu0 %v1029
    %v1177 = vpop.f32.mrb[0].mxu0
    %v1178 = vadd.f32 0.0, %v1177
    %v1179 = vpop.f32.mrb[0].mxu0
    %1180 = vdwg.mxu0
    %v1182 = vrot.slane %v1178, 6
    %v1184 = vadd.f32 %v144, %v1182
    %v1185 = vxor.u32 %v1184, 2147483648
    %v1186 = vmul.f32 %v1185, 1.442695
    %v1187 = vpow.pop %v1186
    %v1188 = vadd.f32 %v1187, 1.0
    %v1189 = vrcp.pop %v1188
    %v1190 = vmul.f32 1.0, %v1189
    %v1191 = vtanh.pop %v1184
    %v1193 = vrot.slane %v1019, 6
    %v1195 = vmul.f32 %v1190, %v1193
    %1197 = vrot.lane.b32.xlu0 %v1191, 64
    %v1198 = vpop.permute.xlu0 %1197
    %v1200 = vmul.f32 %v1190, %v1198
    %1202 = vrot.lane.b32.xlu0 %v1200, 32
    %v1203 = vpop.permute.xlu0 %1202
    %v1205 = vadd.f32 %v1195, %v1203
    %v1206 = vtanh.pop %v1205
    %1208 = vrot.lane.b32.xlu0 %v1206, 64
    %v1209 = vpop.permute.xlu0 %1208
    %v1211 = vmul.f32 %v1190, %v1209
    %v1213 = vrot.slane %v1211, 2
    %1214 = vrot.lane.b32.xlu0 %v1213, 32
    %v1215 = vpop.permute.xlu0 %1214
    %v1216 = vsel %vm65, %v1215, 0
    %1218 = vmatprep.subr.mxu0 0.0
    %1219 = vmatpush1.msra.mxu0 %v151
    %1220 = vmatprep.subr.mxu0 0.0
    %1221 = vmatpush1.msra.mxu0 %v152
    %1222 = vmatprep.subr.mxu0 0.0
    %1223 = vmatpush1.msra.mxu0 %v153
    %1224 = vmatprep.subr.mxu0 0.0
    %1225 = vmatpush1.msra.mxu0 %v154
    %1226 = vmatprep.subr.mxu0 0.0
    %1227 = vmatpush1.msra.mxu0 0.0
    %1228 = vmatprep.subr.mxu0 0.0
    %1229 = vmatpush1.msra.mxu0 0.0
    %1230 = vmatprep.subr.mxu0 0.0
    %1231 = vmatpush1.msra.mxu0 0.0
    %1232 = vmatprep.subr.mxu0 0.0
    %1233 = vmatpush1.msra.mxu0 0.0
    %1234 = vmatprep.subr.mxu0 0.0
    %1235 = vmatpush1.msra.mxu0 0.0
    %1236 = vmatprep.subr.mxu0 0.0
    %1237 = vmatpush1.msra.mxu0 0.0
    %1238 = vmatprep.subr.mxu0 0.0
    %1239 = vmatpush1.msra.mxu0 0.0
    %1240 = vmatprep.subr.mxu0 0.0
    %1241 = vmatpush1.msra.mxu0 0.0
    %1242 = vmatprep.subr.mxu0 0.0
    %1243 = vmatpush1.msra.mxu0 0.0
    %1244 = vmatprep.subr.mxu0 0.0
    %1245 = vmatpush1.msra.mxu0 0.0
    %1246 = vmatprep.subr.mxu0 0.0
    %1247 = vmatpush1.msra.mxu0 0.0
    %1248 = vmatprep.subr.mxu0 0.0
    %1249 = vmatpush1.msra.mxu0 0.0
    %1250 = vmatprep.subr.mxu0 0.0
    %1251 = vmatpush1.msra.mxu0 0.0
    %1252 = vmatprep.subr.mxu0 0.0
    %1253 = vmatpush1.msra.mxu0 0.0
    %1254 = vmatprep.subr.mxu0 0.0
    %1255 = vmatpush1.msra.mxu0 0.0
    %1256 = vmatprep.subr.mxu0 0.0
    %1257 = vmatpush1.msra.mxu0 0.0
    %1258 = vmatprep.subr.mxu0 0.0
    %1259 = vmatpush1.msra.mxu0 0.0
    %1260 = vmatprep.subr.mxu0 0.0
    %1261 = vmatpush1.msra.mxu0 0.0
    %1262 = vmatprep.subr.mxu0 0.0
    %1263 = vmatpush1.msra.mxu0 0.0
    %1264 = vmatprep.subr.mxu0 0.0
    %1265 = vmatpush1.msra.mxu0 0.0
    %1266 = vmatprep.subr.mxu0 0.0
    %1267 = vmatpush1.msra.mxu0 0.0
    %1268 = vmatprep.subr.mxu0 0.0
    %1269 = vmatpush1.msra.mxu0 0.0
    %1270 = vmatprep.subr.mxu0 0.0
    %1271 = vmatpush1.msra.mxu0 0.0
    %1272 = vmatprep.subr.mxu0 0.0
    %1273 = vmatpush1.msra.mxu0 0.0
    %1274 = vmatprep.subr.mxu0 0.0
    %1275 = vmatpush1.msra.mxu0 0.0
    %1276 = vmatprep.subr.mxu0 0.0
    %1277 = vmatpush1.msra.mxu0 0.0
    %1278 = vmatprep.subr.mxu0 0.0
    %1279 = vmatpush1.msra.mxu0 0.0
    %1280 = vmatprep.subr.mxu0 0.0
    %1281 = vmatpush1.msra.mxu0 0.0
    %1282 = vmatprep.mubr.f32.mxu0 0.0
    %1283 = vmatmul.mubr.f32.gmra.mrb[0].mxu0 %v1216
    %v1284 = vpop.f32.mrb[0].mxu0
    %v1285 = vadd.f32 %v259, %v1284
    %v1286 = vpop.f32.mrb[0].mxu0
    %1287 = vdwg.mxu0
    %v1288 = vmul.f32 %v1211, %v342
    %1290 = vrot.lane.b32.xlu0 %v1288, 32
    %v1291 = vpop.permute.xlu0 %1290
    %v1293 = vsel %vm537, %v1291, 0.0
    %1294 = vadd.xlane.f32.xlu0 %v1293
    %v1295 = vpop.xlane.xlu0 %1294
    %v1297 = vrot.slane %v1295, 2
    %v1299 = vmul.f32 %v1285, %v1297
    %v1300 = vadd.f32 %v1110, %v1299
    %1301 = vmatprep.subr.mxu0 0.0
    %1302 = vmatpush1.msra.mxu0 %v147
    %1303 = vmatprep.subr.mxu0 0.0
    %1304 = vmatpush1.msra.mxu0 %v148
    %1305 = vmatprep.subr.mxu0 0.0
    %1306 = vmatpush1.msra.mxu0 %v149
    %1307 = vmatprep.subr.mxu0 0.0
    %1308 = vmatpush1.msra.mxu0 %v150
    %1309 = vmatprep.subr.mxu0 0.0
    %1310 = vmatpush1.msra.mxu0 0.0
    %1311 = vmatprep.subr.mxu0 0.0
    %1312 = vmatpush1.msra.mxu0 0.0
    %1313 = vmatprep.subr.mxu0 0.0
    %1314 = vmatpush1.msra.mxu0 0.0
    %1315 = vmatprep.subr.mxu0 0.0
    %1316 = vmatpush1.msra.mxu0 0.0
    %1317 = vmatprep.subr.mxu0 0.0
    %1318 = vmatpush1.msra.mxu0 0.0
    %1319 = vmatprep.subr.mxu0 0.0
    %1320 = vmatpush1.msra.mxu0 0.0
    %1321 = vmatprep.subr.mxu0 0.0
    %1322 = vmatpush1.msra.mxu0 0.0
    %1323 = vmatprep.subr.mxu0 0.0
    %1324 = vmatpush1.msra.mxu0 0.0
    %1325 = vmatprep.subr.mxu0 0.0
    %1326 = vmatpush1.msra.mxu0 0.0
    %1327 = vmatprep.subr.mxu0 0.0
    %1328 = vmatpush1.msra.mxu0 0.0
    %1329 = vmatprep.subr.mxu0 0.0
    %1330 = vmatpush1.msra.mxu0 0.0
    %1331 = vmatprep.subr.mxu0 0.0
    %1332 = vmatpush1.msra.mxu0 0.0
    %1333 = vmatprep.subr.mxu0 0.0
    %1334 = vmatpush1.msra.mxu0 0.0
    %1335 = vmatprep.subr.mxu0 0.0
    %1336 = vmatpush1.msra.mxu0 0.0
    %1337 = vmatprep.subr.mxu0 0.0
    %1338 = vmatpush1.msra.mxu0 0.0
    %1339 = vmatprep.subr.mxu0 0.0
    %1340 = vmatpush1.msra.mxu0 0.0
    %1341 = vmatprep.subr.mxu0 0.0
    %1342 = vmatpush1.msra.mxu0 0.0
    %1343 = vmatprep.subr.mxu0 0.0
    %1344 = vmatpush1.msra.mxu0 0.0
    %1345 = vmatprep.subr.mxu0 0.0
    %1346 = vmatpush1.msra.mxu0 0.0
    %1347 = vmatprep.subr.mxu0 0.0
    %1348 = vmatpush1.msra.mxu0 0.0
    %1349 = vmatprep.subr.mxu0 0.0
    %1350 = vmatpush1.msra.mxu0 0.0
    %1351 = vmatprep.subr.mxu0 0.0
    %1352 = vmatpush1.msra.mxu0 0.0
    %1353 = vmatprep.subr.mxu0 0.0
    %1354 = vmatpush1.msra.mxu0 0.0
    %1355 = vmatprep.subr.mxu0 0.0
    %1356 = vmatpush1.msra.mxu0 0.0
    %1357 = vmatprep.subr.mxu0 0.0
    %1358 = vmatpush1.msra.mxu0 0.0
    %1359 = vmatprep.subr.mxu0 0.0
    %1360 = vmatpush1.msra.mxu0 0.0
    %1361 = vmatprep.subr.mxu0 0.0
    %1362 = vmatpush1.msra.mxu0 0.0
    %1363 = vmatprep.subr.mxu0 0.0
    %1364 = vmatpush1.msra.mxu0 0.0
    %1365 = vmatprep.mubr.f32.mxu0 0.0
    %1366 = vmatmul.mubr.f32.gmra.mrb[0].mxu0 %v1216
    %v1367 = vpop.f32.mrb[0].mxu0
    %v1368 = vadd.f32 0.0, %v1367
    %v1369 = vpop.f32.mrb[0].mxu0
    %1370 = vdwg.mxu0
    %v1372 = vrot.slane %v1368, 4
    %v1374 = vadd.f32 %v144, %v1372
    %v1375 = vxor.u32 %v1374, 2147483648
    %v1376 = vmul.f32 %v1375, 1.442695
    %v1377 = vpow.pop %v1376
    %v1378 = vadd.f32 %v1377, 1.0
    %v1379 = vrcp.pop %v1378
    %v1380 = vmul.f32 1.0, %v1379
    %v1381 = vtanh.pop %v1374
    %v1383 = vrot.slane %v1205, 6
    %v1385 = vmul.f32 %v1380, %v1383
    %1387 = vrot.lane.b32.xlu0 %v1381, 64
    %v1388 = vpop.permute.xlu0 %1387
    %v1390 = vmul.f32 %v1380, %v1388
    %1392 = vrot.lane.b32.xlu0 %v1390, 32
    %v1393 = vpop.permute.xlu0 %1392
    %v1395 = vadd.f32 %v1385, %v1393
    %v1396 = vtanh.pop %v1395
    %1398 = vrot.lane.b32.xlu0 %v1396, 64
    %v1399 = vpop.permute.xlu0 %1398
    %v1401 = vmul.f32 %v1380, %v1399
    %v1403 = vrot.slane %v1401, 4
    %1404 = vrot.lane.b32.xlu0 %v1403, 32
    %v1405 = vpop.permute.xlu0 %1404
    %v1406 = vsel %vm65, %v1405, 0
    %1408 = vmatprep.subr.mxu0 0.0
    %1409 = vmatpush1.msra.mxu0 %v151
    %1410 = vmatprep.subr.mxu0 0.0
    %1411 = vmatpush1.msra.mxu0 %v152
    %1412 = vmatprep.subr.mxu0 0.0
    %1413 = vmatpush1.msra.mxu0 %v153
    %1414 = vmatprep.subr.mxu0 0.0
    %1415 = vmatpush1.msra.mxu0 %v154
    %1416 = vmatprep.subr.mxu0 0.0
    %1417 = vmatpush1.msra.mxu0 0.0
    %1418 = vmatprep.subr.mxu0 0.0
    %1419 = vmatpush1.msra.mxu0 0.0
    %1420 = vmatprep.subr.mxu0 0.0
    %1421 = vmatpush1.msra.mxu0 0.0
    %1422 = vmatprep.subr.mxu0 0.0
    %1423 = vmatpush1.msra.mxu0 0.0
    %1424 = vmatprep.subr.mxu0 0.0
    %1425 = vmatpush1.msra.mxu0 0.0
    %1426 = vmatprep.subr.mxu0 0.0
    %1427 = vmatpush1.msra.mxu0 0.0
    %1428 = vmatprep.subr.mxu0 0.0
    %1429 = vmatpush1.msra.mxu0 0.0
    %1430 = vmatprep.subr.mxu0 0.0
    %1431 = vmatpush1.msra.mxu0 0.0
    %1432 = vmatprep.subr.mxu0 0.0
    %1433 = vmatpush1.msra.mxu0 0.0
    %1434 = vmatprep.subr.mxu0 0.0
    %1435 = vmatpush1.msra.mxu0 0.0
    %1436 = vmatprep.subr.mxu0 0.0
    %1437 = vmatpush1.msra.mxu0 0.0
    %1438 = vmatprep.subr.mxu0 0.0
    %1439 = vmatpush1.msra.mxu0 0.0
    %1440 = vmatprep.subr.mxu0 0.0
    %1441 = vmatpush1.msra.mxu0 0.0
    %1442 = vmatprep.subr.mxu0 0.0
    %1443 = vmatpush1.msra.mxu0 0.0
    %1444 = vmatprep.subr.mxu0 0.0
    %1445 = vmatpush1.msra.mxu0 0.0
    %1446 = vmatprep.subr.mxu0 0.0
    %1447 = vmatpush1.msra.mxu0 0.0
    %1448 = vmatprep.subr.mxu0 0.0
    %1449 = vmatpush1.msra.mxu0 0.0
    %1450 = vmatprep.subr.mxu0 0.0
    %1451 = vmatpush1.msra.mxu0 0.0
    %1452 = vmatprep.subr.mxu0 0.0
    %1453 = vmatpush1.msra.mxu0 0.0
    %1454 = vmatprep.subr.mxu0 0.0
    %1455 = vmatpush1.msra.mxu0 0.0
    %1456 = vmatprep.subr.mxu0 0.0
    %1457 = vmatpush1.msra.mxu0 0.0
    %1458 = vmatprep.subr.mxu0 0.0
    %1459 = vmatpush1.msra.mxu0 0.0
    %1460 = vmatprep.subr.mxu0 0.0
    %1461 = vmatpush1.msra.mxu0 0.0
    %1462 = vmatprep.subr.mxu0 0.0
    %1463 = vmatpush1.msra.mxu0 0.0
    %1464 = vmatprep.subr.mxu0 0.0
    %1465 = vmatpush1.msra.mxu0 0.0
    %1466 = vmatprep.subr.mxu0 0.0
    %1467 = vmatpush1.msra.mxu0 0.0
    %1468 = vmatprep.subr.mxu0 0.0
    %1469 = vmatpush1.msra.mxu0 0.0
    %1470 = vmatprep.subr.mxu0 0.0
    %1471 = vmatpush1.msra.mxu0 0.0
    %1472 = vmatprep.mubr.f32.mxu0 0.0
    %1473 = vmatmul.mubr.f32.gmra.mrb[0].mxu0 %v1406
    %v1474 = vpop.f32.mrb[0].mxu0
    %v1475 = vadd.f32 %v259, %v1474
    %v1476 = vpop.f32.mrb[0].mxu0
    %1477 = vdwg.mxu0
    %v1478 = vmul.f32 %v1401, %v342
    %1480 = vrot.lane.b32.xlu0 %v1478, 32
    %v1481 = vpop.permute.xlu0 %1480
    %v1483 = vsel %vm728, %v1481, 0.0
    %1484 = vadd.xlane.f32.xlu0 %v1483
    %v1485 = vpop.xlane.xlu0 %1484
    %v1487 = vrot.slane %v1485, 4
    %v1489 = vmul.f32 %v1475, %v1487
    %v1490 = vadd.f32 %v1300, %v1489
    %1491 = vmatprep.subr.mxu0 0.0
    %1492 = vmatpush1.msra.mxu0 %v147
    %1493 = vmatprep.subr.mxu0 0.0
    %1494 = vmatpush1.msra.mxu0 %v148
    %1495 = vmatprep.subr.mxu0 0.0
    %1496 = vmatpush1.msra.mxu0 %v149
    %1497 = vmatprep.subr.mxu0 0.0
    %1498 = vmatpush1.msra.mxu0 %v150
    %1499 = vmatprep.subr.mxu0 0.0
    %1500 = vmatpush1.msra.mxu0 0.0
    %1501 = vmatprep.subr.mxu0 0.0
    %1502 = vmatpush1.msra.mxu0 0.0
    %1503 = vmatprep.subr.mxu0 0.0
    %1504 = vmatpush1.msra.mxu0 0.0
    %1505 = vmatprep.subr.mxu0 0.0
    %1506 = vmatpush1.msra.mxu0 0.0
    %1507 = vmatprep.subr.mxu0 0.0
    %1508 = vmatpush1.msra.mxu0 0.0
    %1509 = vmatprep.subr.mxu0 0.0
    %1510 = vmatpush1.msra.mxu0 0.0
    %1511 = vmatprep.subr.mxu0 0.0
    %1512 = vmatpush1.msra.mxu0 0.0
    %1513 = vmatprep.subr.mxu0 0.0
    %1514 = vmatpush1.msra.mxu0 0.0
    %1515 = vmatprep.subr.mxu0 0.0
    %1516 = vmatpush1.msra.mxu0 0.0
    %1517 = vmatprep.subr.mxu0 0.0
    %1518 = vmatpush1.msra.mxu0 0.0
    %1519 = vmatprep.subr.mxu0 0.0
    %1520 = vmatpush1.msra.mxu0 0.0
    %1521 = vmatprep.subr.mxu0 0.0
    %1522 = vmatpush1.msra.mxu0 0.0
    %1523 = vmatprep.subr.mxu0 0.0
    %1524 = vmatpush1.msra.mxu0 0.0
    %1525 = vmatprep.subr.mxu0 0.0
    %1526 = vmatpush1.msra.mxu0 0.0
    %1527 = vmatprep.subr.mxu0 0.0
    %1528 = vmatpush1.msra.mxu0 0.0
    %1529 = vmatprep.subr.mxu0 0.0
    %1530 = vmatpush1.msra.mxu0 0.0
    %1531 = vmatprep.subr.mxu0 0.0
    %1532 = vmatpush1.msra.mxu0 0.0
    %1533 = vmatprep.subr.mxu0 0.0
    %1534 = vmatpush1.msra.mxu0 0.0
    %1535 = vmatprep.subr.mxu0 0.0
    %1536 = vmatpush1.msra.mxu0 0.0
    %1537 = vmatprep.subr.mxu0 0.0
    %1538 = vmatpush1.msra.mxu0 0.0
    %1539 = vmatprep.subr.mxu0 0.0
    %1540 = vmatpush1.msra.mxu0 0.0
    %1541 = vmatprep.subr.mxu0 0.0
    %1542 = vmatpush1.msra.mxu0 0.0
    %1543 = vmatprep.subr.mxu0 0.0
    %1544 = vmatpush1.msra.mxu0 0.0
    %1545 = vmatprep.subr.mxu0 0.0
    %1546 = vmatpush1.msra.mxu0 0.0
    %1547 = vmatprep.subr.mxu0 0.0
    %1548 = vmatpush1.msra.mxu0 0.0
    %1549 = vmatprep.subr.mxu0 0.0
    %1550 = vmatpush1.msra.mxu0 0.0
    %1551 = vmatprep.subr.mxu0 0.0
    %1552 = vmatpush1.msra.mxu0 0.0
    %1553 = vmatprep.subr.mxu0 0.0
    %1554 = vmatpush1.msra.mxu0 0.0
    %1555 = vmatprep.mubr.f32.mxu0 0.0
    %1556 = vmatmul.mubr.f32.gmra.mrb[0].mxu0 %v1406
    %v1557 = vpop.f32.mrb[0].mxu0
    %v1558 = vadd.f32 0.0, %v1557
    %v1559 = vpop.f32.mrb[0].mxu0
    %1560 = vdwg.mxu0
    %v1562 = vrot.slane %v1558, 2
    %v1564 = vadd.f32 %v144, %v1562
    %v1565 = vxor.u32 %v1564, 2147483648
    %v1566 = vmul.f32 %v1565, 1.442695
    %v1567 = vpow.pop %v1566
    %v1568 = vadd.f32 %v1567, 1.0
    %v1569 = vrcp.pop %v1568
    %v1570 = vmul.f32 1.0, %v1569
    %v1571 = vtanh.pop %v1564
    %v1573 = vrot.slane %v1395, 6
    %v1575 = vmul.f32 %v1570, %v1573
    %1577 = vrot.lane.b32.xlu0 %v1571, 64
    %v1578 = vpop.permute.xlu0 %1577
    %v1580 = vmul.f32 %v1570, %v1578
    %1582 = vrot.lane.b32.xlu0 %v1580, 32
    %v1583 = vpop.permute.xlu0 %1582
    %v1585 = vadd.f32 %v1575, %v1583
    %v1586 = vtanh.pop %v1585
    %1588 = vrot.lane.b32.xlu0 %v1586, 64
    %v1589 = vpop.permute.xlu0 %1588
    %v1591 = vmul.f32 %v1570, %v1589
    %v1593 = vrot.slane %v1591, 6
    %1594 = vrot.lane.b32.xlu0 %v1593, 32
    %v1595 = vpop.permute.xlu0 %1594
    %v1596 = vsel %vm65, %v1595, 0
    %1598 = vmatprep.subr.mxu0 0.0
    %1599 = vmatpush1.msra.mxu0 %v151
    %1600 = vmatprep.subr.mxu0 0.0
    %1601 = vmatpush1.msra.mxu0 %v152
    %1602 = vmatprep.subr.mxu0 0.0
    %1603 = vmatpush1.msra.mxu0 %v153
    %1604 = vmatprep.subr.mxu0 0.0
    %1605 = vmatpush1.msra.mxu0 %v154
    %1606 = vmatprep.subr.mxu0 0.0
    %1607 = vmatpush1.msra.mxu0 0.0
    %1608 = vmatprep.subr.mxu0 0.0
    %1609 = vmatpush1.msra.mxu0 0.0
    %1610 = vmatprep.subr.mxu0 0.0
    %1611 = vmatpush1.msra.mxu0 0.0
    %1612 = vmatprep.subr.mxu0 0.0
    %1613 = vmatpush1.msra.mxu0 0.0
    %1614 = vmatprep.subr.mxu0 0.0
    %1615 = vmatpush1.msra.mxu0 0.0
    %1616 = vmatprep.subr.mxu0 0.0
    %1617 = vmatpush1.msra.mxu0 0.0
    %1618 = vmatprep.subr.mxu0 0.0
    %1619 = vmatpush1.msra.mxu0 0.0
    %1620 = vmatprep.subr.mxu0 0.0
    %1621 = vmatpush1.msra.mxu0 0.0
    %1622 = vmatprep.subr.mxu0 0.0
    %1623 = vmatpush1.msra.mxu0 0.0
    %1624 = vmatprep.subr.mxu0 0.0
    %1625 = vmatpush1.msra.mxu0 0.0
    %1626 = vmatprep.subr.mxu0 0.0
    %1627 = vmatpush1.msra.mxu0 0.0
    %1628 = vmatprep.subr.mxu0 0.0
    %1629 = vmatpush1.msra.mxu0 0.0
    %1630 = vmatprep.subr.mxu0 0.0
    %1631 = vmatpush1.msra.mxu0 0.0
    %1632 = vmatprep.subr.mxu0 0.0
    %1633 = vmatpush1.msra.mxu0 0.0
    %1634 = vmatprep.subr.mxu0 0.0
    %1635 = vmatpush1.msra.mxu0 0.0
    %1636 = vmatprep.subr.mxu0 0.0
    %1637 = vmatpush1.msra.mxu0 0.0
    %1638 = vmatprep.subr.mxu0 0.0
    %1639 = vmatpush1.msra.mxu0 0.0
    %1640 = vmatprep.subr.mxu0 0.0
    %1641 = vmatpush1.msra.mxu0 0.0
    %1642 = vmatprep.subr.mxu0 0.0
    %1643 = vmatpush1.msra.mxu0 0.0
    %1644 = vmatprep.subr.mxu0 0.0
    %1645 = vmatpush1.msra.mxu0 0.0
    %1646 = vmatprep.subr.mxu0 0.0
    %1647 = vmatpush1.msra.mxu0 0.0
    %1648 = vmatprep.subr.mxu0 0.0
    %1649 = vmatpush1.msra.mxu0 0.0
    %1650 = vmatprep.subr.mxu0 0.0
    %1651 = vmatpush1.msra.mxu0 0.0
    %1652 = vmatprep.subr.mxu0 0.0
    %1653 = vmatpush1.msra.mxu0 0.0
    %1654 = vmatprep.subr.mxu0 0.0
    %1655 = vmatpush1.msra.mxu0 0.0
    %1656 = vmatprep.subr.mxu0 0.0
    %1657 = vmatpush1.msra.mxu0 0.0
    %1658 = vmatprep.subr.mxu0 0.0
    %1659 = vmatpush1.msra.mxu0 0.0
    %1660 = vmatprep.subr.mxu0 0.0
    %1661 = vmatpush1.msra.mxu0 0.0
    %1662 = vmatprep.mubr.f32.mxu0 0.0
    %1663 = vmatmul.mubr.f32.gmra.mrb[0].mxu0 %v1596
    %v1664 = vpop.f32.mrb[0].mxu0
    %v1665 = vadd.f32 %v259, %v1664
    %v1666 = vpop.f32.mrb[0].mxu0
    %1667 = vdwg.mxu0
    %v1668 = vmul.f32 %v1591, %v342
    %1670 = vrot.lane.b32.xlu0 %v1668, 32
    %v1671 = vpop.permute.xlu0 %1670
    %v1673 = vsel %vm919, %v1671, 0.0
    %1674 = vadd.xlane.f32.xlu0 %v1673
    %v1675 = vpop.xlane.xlu0 %1674
    %v1677 = vrot.slane %v1675, 6
    %v1679 = vmul.f32 %v1665, %v1677
    %v1680 = vadd.f32 %v1490, %v1679
    %v1681 = vld [vmem:[#allocation2] sm:$0x1]
    %v1683 = vlaneseq
    %v1684 = vshrl.u32 %v1683, 7
    %v1685 = vsub.s32 0, %v1684
    %v1686 = vrot.slane %v1681, %v1685
    %1687 = vset.pattern.permute.xlu0 0
    %1688 = vperm.xlu0 %1687, %v1686
    %v1689 = vpop.permute.xlu0 %1688
    %v1691 = vadd.f32 %v1680, %v1689
    %v1692 = vmax.f32 %v1691, 0.0
    %v1693 = vld [vmem:[%s8] sm:$0xff]
    %v1694 = vld [vmem:[%s8 + $0x8] sm:$0xff]
    %v1695 = vld [vmem:[%s9] sm:$0x1]
    %v1697 = vlaneseq
    %v1698 = vshrl.u32 %v1697, 7
    %v1699 = vsub.s32 0, %v1698
    %v1700 = vrot.slane %v1695, %v1699
    %vm1702 = vcmask 130048
    %v1704 = vsel %vm1702, %v1692, 0
    %1706 = vmatprep.subr.mxu0 0.0
    %1707 = vmatpush1.msra.mxu0 %v1693
    %1708 = vmatprep.subr.mxu0 0.0
    %1709 = vmatpush1.msra.mxu0 %v1694
    %1710 = vmatprep.subr.mxu0 0.0
    %1711 = vmatpush1.msra.mxu0 0.0
    %1712 = vmatprep.subr.mxu0 0.0
    %1713 = vmatpush1.msra.mxu0 0.0
    %1714 = vmatprep.subr.mxu0 0.0
    %1715 = vmatpush1.msra.mxu0 0.0
    %1716 = vmatprep.subr.mxu0 0.0
    %1717 = vmatpush1.msra.mxu0 0.0
    %1718 = vmatprep.subr.mxu0 0.0
    %1719 = vmatpush1.msra.mxu0 0.0
    %1720 = vmatprep.subr.mxu0 0.0
    %1721 = vmatpush1.msra.mxu0 0.0
    %1722 = vmatprep.subr.mxu0 0.0
    %1723 = vmatpush1.msra.mxu0 0.0
    %1724 = vmatprep.subr.mxu0 0.0
    %1725 = vmatpush1.msra.mxu0 0.0
    %1726 = vmatprep.subr.mxu0 0.0
    %1727 = vmatpush1.msra.mxu0 0.0
    %1728 = vmatprep.subr.mxu0 0.0
    %1729 = vmatpush1.msra.mxu0 0.0
    %1730 = vmatprep.subr.mxu0 0.0
    %1731 = vmatpush1.msra.mxu0 0.0
    %1732 = vmatprep.subr.mxu0 0.0
    %1733 = vmatpush1.msra.mxu0 0.0
    %1734 = vmatprep.subr.mxu0 0.0
    %1735 = vmatpush1.msra.mxu0 0.0
    %1736 = vmatprep.subr.mxu0 0.0
    %1737 = vmatpush1.msra.mxu0 0.0
    %1738 = vmatprep.subr.mxu0 0.0
    %1739 = vmatpush1.msra.mxu0 0.0
    %1740 = vmatprep.subr.mxu0 0.0
    %1741 = vmatpush1.msra.mxu0 0.0
    %1742 = vmatprep.subr.mxu0 0.0
    %1743 = vmatpush1.msra.mxu0 0.0
    %1744 = vmatprep.subr.mxu0 0.0
    %1745 = vmatpush1.msra.mxu0 0.0
    %1746 = vmatprep.subr.mxu0 0.0
    %1747 = vmatpush1.msra.mxu0 0.0
    %1748 = vmatprep.subr.mxu0 0.0
    %1749 = vmatpush1.msra.mxu0 0.0
    %1750 = vmatprep.subr.mxu0 0.0
    %1751 = vmatpush1.msra.mxu0 0.0
    %1752 = vmatprep.subr.mxu0 0.0
    %1753 = vmatpush1.msra.mxu0 0.0
    %1754 = vmatprep.subr.mxu0 0.0
    %1755 = vmatpush1.msra.mxu0 0.0
    %1756 = vmatprep.subr.mxu0 0.0
    %1757 = vmatpush1.msra.mxu0 0.0
    %1758 = vmatprep.subr.mxu0 0.0
    %1759 = vmatpush1.msra.mxu0 0.0
    %1760 = vmatprep.subr.mxu0 0.0
    %1761 = vmatpush1.msra.mxu0 0.0
    %1762 = vmatprep.subr.mxu0 0.0
    %1763 = vmatpush1.msra.mxu0 0.0
    %1764 = vmatprep.subr.mxu0 0.0
    %1765 = vmatpush1.msra.mxu0 0.0
    %1766 = vmatprep.subr.mxu0 0.0
    %1767 = vmatpush1.msra.mxu0 0.0
    %1768 = vmatprep.subr.mxu0 0.0
    %1769 = vmatpush1.msra.mxu0 0.0
    %1770 = vmatprep.mubr.f32.mxu0 0.0
    %1771 = vmatmul.mubr.f32.gmra.mrb[0].mxu0 %v1704
    %v1772 = vpop.f32.mrb[0].mxu0
    %v1773 = vadd.f32 %v1700, %v1772
    %v1774 = vpop.f32.mrb[0].mxu0
    %1775 = vdwg.mxu0
    %v1776 = vmax.f32 %v1773, 0.0
    %vm1777 = vcmask 25600
    %v1778 = vsel %vm1777, %v1776, -inf
    %1779 = vmax.xlane.f32.xlu0 %v1778
    %v1780 = vpop.xlane.xlu0 %1779
    %v1781 = vsub.f32 %v1776, %v1780
    %v1782 = vmul.f32 %v1781, 1.442695
    %v1783 = vpow.pop %v1782
    %v1784 = vsel %vm1777, %v1783, 0.0
    %1785 = vadd.xlane.f32.xlu0 %v1784
    %v1786 = vpop.xlane.xlu0 %1785
    %v1787 = vrcp.pop %v1786
    %v1788 = vmul.f32 %v1783, %v1787
    %1789 = vst.msk [vmem:[#allocation6] sm:$0x3] %vm1777, %v1788
    // Predicated region
    $region46: #{tpu_custom_call.1} parent=1 // pred_check
      _
    $region47: #{tpu_custom_call.1} parent=1 // pred_check_branch
      %1791 = sbr.rel (0) target = $region49
    $region48: #{tpu_custom_call.1} parent=1 // pred_region
      %s1793 = ssub.s32 32, 32
      %1794 = vsyncadd [#allocation5], %s1793
      %s1796 = sshll.u32 [#allocation6], 4
      %s1797 = int_to_ptr.vmem [resolvable:$true] %s1796
      %1799 = dma.vmem_to_hbm [thread:$0]  %s1797, 32, %s10, [#allocation5]
    $region49: #{tpu_custom_call.1} parent=1 // pred_fallthru
      _
    // Predicated region
    $region50: #{tpu_custom_call.1} parent=1 // pred_check
      _
    $region51: #{tpu_custom_call.1} parent=1 // pred_check_branch
      %1801 = sbr.rel (0) target = $region53
    $region52: #{tpu_custom_call.1} parent=1 // pred_region
      %1802 = dma.done [#allocation5], 32
    $region53: #{tpu_custom_call.1} parent=1 // pred_fallthru
      _
    %1803 = vsyncpa [#allocation4], 1
    %1804 = vsyncpa [#allocation5], 1

</llo_original>
